<compile_context>
chip_gen: v6e
topology: v6e:2x2x1
jax: 0.10.0
libtpu: 0.0.40
codegen_flags: <defaults>
</compile_context>

<pallas_src>
import jax
import jax.numpy as jnp
import numpy as np
from jax.experimental import pallas as pl
from jax.experimental.pallas import tpu as pltpu

BN_EPS = 1e-5


def basic_block_forward(x_nchw, params):
    """Pallas BasicBlock forward. x_nchw: (N, Cin, H, W) -> (N, Cout, H, W)."""
    w1, g1, b1, w2, g2, b2 = params
    N, Cin, H, W = x_nchw.shape
    Cout = w1.shape[-1]
    assert Cin == Cout, "identity residual requires inplanes == planes"

    HW = H * W
    P = N * HW                                   # flattened batch*spatial (lane axis)
    C8 = ((max(Cin, Cout) + 7) // 8) * 8         # channels padded to sublane tile
    K = 9 * C8                                   # im2col contraction size
    HALO = ((W + 1 + 127) // 128) * 128          # lane-aligned halo (>= W+1)
    inv_p = 1.0 / float(P)
    offsets = [(dh, dw) for dh in (-1, 0, 1) for dw in (-1, 0, 1)]  # kh*3+kw order

    # Layout/alignment assumptions (checked, not silent).
    assert P % 128 == 0, "N*H*W must be a multiple of 128 for lane-dense layout"
    assert HALO >= W + 1, "halo must cover the largest tap shift"
    assert all(abs(dh * W + dw) <= HALO for dh, dw in offsets)

    # ---- wrapper-side packing: NO activation transpose (reshape is free) ----
    x3 = x_nchw.reshape(N, Cin, HW).astype(jnp.float32)            # (N, Cin, HW)

    def pack_w(w):                               # HWIO (3,3,ci,co) -> bf16 (C8, 9*C8)
        wp = jnp.zeros((3, 3, C8, C8), jnp.float32)
        wp = wp.at[:, :, :w.shape[2], :w.shape[3]].set(w.astype(jnp.float32))
        # row-major flatten of (cout, kh, kw, cin): column index = (kh*3+kw)*C8 + cin
        return jnp.transpose(wp, (3, 0, 1, 2)).reshape(C8, K).astype(jnp.bfloat16)

    def pack_v(v):                               # (C,) -> (C8, 1) f32, zero padded
        return jnp.pad(v.astype(jnp.float32).reshape(-1),
                       (0, C8 - v.shape[0])).reshape(C8, 1)

    w1k, w2k = pack_w(w1), pack_w(w2)
    g1k, b1k, g2k, b2k = pack_v(g1), pack_v(b1), pack_v(g2), pack_v(b2)

    # Per-tap validity masks (zero-padding conv semantics), host-precomputed
    # constant (9, P): removes per-step iota/compare VPU work from the kernel.
    pos = np.arange(P)
    w_idx = pos % W
    h_idx = (pos // W) % H
    mask_np = np.zeros((9, P), np.float32)
    for k, (dh, dw) in enumerate(offsets):
        valid = ((h_idx + dh >= 0) & (h_idx + dh < H) &
                 (w_idx + dw >= 0) & (w_idx + dw < W))
        mask_np[k] = valid.astype(np.float32)
    maskk = jnp.asarray(mask_np)

    def kernel(x_ref, mask_ref, w1_ref, g1_ref, b1_ref, w2_ref, g2_ref, b2_ref,
               o_ref, xpad_ref, col_ref):
        # Zero the padded-activation scratch once: halo lanes and padded
        # channel rows stay zero for both convs; the interior gets overwritten.
        xpad_ref[...] = jnp.zeros((C8, P + 2 * HALO), jnp.float32)

        # Repack x (N, Cin, HW) -> channel-major (C8, P) interior of xpad.
        # Lane offsets HALO + n*HW are multiples of 128 here.
        for n in range(N):
            xpad_ref[:Cin, HALO + n * HW:HALO + (n + 1) * HW] = x_ref[n]
        x_val = xpad_ref[:, HALO:HALO + P]       # (C8, P) f32, residual copy

        def conv(w_ref):
            # im2col: nine shifted, masked slices -> bf16 col scratch,
            # then a single K = 9*C8 MXU contraction (bf16 x bf16 -> f32).
            for k, (dh, dw) in enumerate(offsets):
                off = dh * W + dw
                piece = (xpad_ref[:, HALO + off:HALO + off + P]
                         * mask_ref[k:k + 1, :])
                col_ref[k * C8:(k + 1) * C8, :] = piece.astype(jnp.bfloat16)
            return jnp.dot(w_ref[...], col_ref[...],
                           preferred_element_type=jnp.float32)      # (C8, P) f32

        def bn(out, g_ref, b_ref):
            # Train-mode BatchNorm, centered two-pass (no E[x^2]-E[x]^2
            # cancellation), biased variance, f32 math.
            mean = jnp.sum(out, axis=1, keepdims=True) * inv_p
            cen = out - mean
            var = jnp.sum(cen * cen, axis=1, keepdims=True) * inv_p
            return cen * jax.lax.rsqrt(var + BN_EPS) * g_ref[...] + b_ref[...]

        out1 = jnp.maximum(bn(conv(w1_ref), g1_ref, b1_ref), 0.0)
        xpad_ref[:, HALO:HALO + P] = out1        # reuse halo scratch for conv2
        out2 = bn(conv(w2_ref), g2_ref, b2_ref)
        res = jnp.maximum(out2 + x_val, 0.0)     # pre-relu identity residual

        # Write back per image in the (N, Cout, HW) layout (lane-dense: HW is a
        # multiple of 128) so the wrapper needs only a free reshape to NCHW.
        for n in range(N):
            o_ref[n] = res[:Cout, n * HW:(n + 1) * HW]

    args = (x3, maskk, w1k, g1k, b1k, w2k, g2k, b2k)

    def full_spec(a):
        if a.ndim == 3:
            return pl.BlockSpec(a.shape, lambda i: (0, 0, 0))
        return pl.BlockSpec(a.shape, lambda i: (0, 0))

    # VMEM budget: actual usage with headroom, capped under v7x's 64 MiB.
    est_bytes = (C8 * (P + 2 * HALO) * 4            # xpad scratch (f32)
                 + K * P * 2                        # col scratch (bf16)
                 + 2 * (x3.size * 4 + maskk.size * 4
                        + (w1k.size + w2k.size) * 2 + 4 * C8 * 4)
                 + 2 * (N * Cout * HW * 4))
    vmem_limit = int(min(max(4 * est_bytes, 8 * 1024 * 1024), 48 * 1024 * 1024))

    out = pl.pallas_call(
        kernel,
        out_shape=jax.ShapeDtypeStruct((N, Cout, HW), jnp.float32),
        grid_spec=pltpu.PrefetchScalarGridSpec(
            num_scalar_prefetch=0,
            grid=(1,),
            in_specs=[full_spec(a) for a in args],
            out_specs=pl.BlockSpec((N, Cout, HW), lambda i: (0, 0, 0)),
            scratch_shapes=[pltpu.VMEM((C8, P + 2 * HALO), jnp.float32),
                            pltpu.VMEM((K, P), jnp.bfloat16)],
        ),
        compiler_params=pltpu.CompilerParams(
            dimension_semantics=("arbitrary",),
            vmem_limit_bytes=vmem_limit),
    )(*args)

    return out.reshape(N, Cout, H, W)            # free reshape, already NCHW order


def basic_block_reference(x_nchw, params):
    """Pure-JAX f32 reference mirroring the PyTorch forward (train-mode BN)."""
    w1, g1, b1, w2, g2, b2 = params
    x = jnp.transpose(x_nchw, (0, 2, 3, 1)).astype(jnp.float32)

    def conv(inp, w):
        return jax.lax.conv_general_dilated(
            inp, w, window_strides=(1, 1), padding=((1, 1), (1, 1)),
            dimension_numbers=('NHWC', 'HWIO', 'NHWC'),
            precision=jax.lax.Precision.HIGHEST)

    def bn(inp, g, b):
        mean = inp.mean(axis=(0, 1, 2), keepdims=True)
        var = ((inp - mean) ** 2).mean(axis=(0, 1, 2), keepdims=True)
        return (inp - mean) * jax.lax.rsqrt(var + BN_EPS) * g + b

    out = jnp.maximum(bn(conv(x, w1), g1, b1), 0.0)
    out = bn(conv(out, w2), g2, b2) + x
    out = jnp.maximum(out, 0.0)
    return jnp.transpose(out, (0, 3, 1, 2))


if __name__ == "__main__":
    # Small shapes consistent with the module: inplanes = planes = 4.
    N, C, H, W = 2, 4, 16, 16
    key = jax.random.PRNGKey(0)
    kx, kw1, kw2, kg1, kb1, kg2, kb2 = jax.random.split(key, 7)

    x = jax.random.normal(kx, (N, C, H, W), dtype=jnp.float32)        # NCHW like PyTorch
    # Conv weights created directly in HWIO (3, 3, Cin, Cout), no bias (bias=False).
    w1 = 0.1 * jax.random.normal(kw1, (3, 3, C, C), dtype=jnp.float32)
    w2 = 0.1 * jax.random.normal(kw2, (3, 3, C, C), dtype=jnp.float32)
    # BatchNorm affine params (gamma, beta) per output channel.
    g1 = 1.0 + 0.1 * jax.random.normal(kg1, (C,), dtype=jnp.float32)
    b1 = 0.1 * jax.random.normal(kb1, (C,), dtype=jnp.float32)
    g2 = 1.0 + 0.1 * jax.random.normal(kg2, (C,), dtype=jnp.float32)
    b2 = 0.1 * jax.random.normal(kb2, (C,), dtype=jnp.float32)
    params = (w1, g1, b1, w2, g2, b2)

    out = jax.block_until_ready(basic_block_forward(x, params))
    ref = jax.block_until_ready(basic_block_reference(x, params))

    assert out.shape == (N, C, H, W) and out.dtype == jnp.float32
    # Kernel feeds bf16 operands to the MXU (per perf review) while the
    # reference convolutions run in f32 HIGHEST precision, so the tolerance is
    # loosened accordingly (values are O(1)).
    np.testing.assert_allclose(np.asarray(out), np.asarray(ref), rtol=5e-2, atol=5e-2)
    print("KERNEL_OK")
</pallas_src>

<mosaic_0001>
module attributes {stable_mosaic.version = 11 : i64} {
  func.func @kernel(%arg0: i32, %arg1: memref<2x4x256xf32, #tpu.memory_space<vmem>>, %arg2: memref<9x512xf32, #tpu.memory_space<vmem>>, %arg3: memref<8x72xbf16, #tpu.memory_space<vmem>>, %arg4: memref<8x1xf32, #tpu.memory_space<vmem>>, %arg5: memref<8x1xf32, #tpu.memory_space<vmem>>, %arg6: memref<8x72xbf16, #tpu.memory_space<vmem>>, %arg7: memref<8x1xf32, #tpu.memory_space<vmem>>, %arg8: memref<8x1xf32, #tpu.memory_space<vmem>>, %arg9: memref<2x4x256xf32, #tpu.memory_space<vmem>>, %arg10: memref<8x768xf32, #tpu.memory_space<vmem>>, %arg11: memref<72x512xbf16, #tpu.memory_space<vmem>>) attributes {dimension_semantics = [#tpu.dimension_semantics<arbitrary>], iteration_bounds = array<i64: 1>, scalar_prefetch = 0 : i64, scratch_operands = 2 : i64, tpu.core_type = #tpu.core_type<tc>, window_params = [{pipeline_mode = #tpu.pipeline_mode<synchronous>, transform_indices = @transform_0, window_bounds = array<i64: 2, 4, 256>}, {pipeline_mode = #tpu.pipeline_mode<synchronous>, transform_indices = @transform_1, window_bounds = array<i64: 9, 512>}, {pipeline_mode = #tpu.pipeline_mode<synchronous>, transform_indices = @transform_2, window_bounds = array<i64: 8, 72>}, {pipeline_mode = #tpu.pipeline_mode<synchronous>, transform_indices = @transform_3, window_bounds = array<i64: 8, 1>}, {pipeline_mode = #tpu.pipeline_mode<synchronous>, transform_indices = @transform_4, window_bounds = array<i64: 8, 1>}, {pipeline_mode = #tpu.pipeline_mode<synchronous>, transform_indices = @transform_5, window_bounds = array<i64: 8, 72>}, {pipeline_mode = #tpu.pipeline_mode<synchronous>, transform_indices = @transform_6, window_bounds = array<i64: 8, 1>}, {pipeline_mode = #tpu.pipeline_mode<synchronous>, transform_indices = @transform_7, window_bounds = array<i64: 8, 1>}, {pipeline_mode = #tpu.pipeline_mode<synchronous>, transform_indices = @transform_8, window_bounds = array<i64: 2, 4, 256>}]} {
    %cst = arith.constant 0.000000e+00 : f32
    %0 = vector.broadcast %cst : f32 to vector<8x768xf32>
    %c0 = arith.constant 0 : index
    %c0_0 = arith.constant 0 : index
    %1 = vector.load %arg10[%c0, %c0_0] : memref<8x768xf32, #tpu.memory_space<vmem>>, vector<8x768xf32>
    tpu.vector_store %arg10[%c0, %c0_0], %0 {strides = array<i32>} : memref<8x768xf32, #tpu.memory_space<vmem>>, vector<8x768xf32>,
    %c0_1 = arith.constant 0 : index
    %c0_2 = arith.constant 0 : index
    %c0_3 = arith.constant 0 : index
    %2 = vector.load %arg1[%c0_1, %c0_2, %c0_3] : memref<2x4x256xf32, #tpu.memory_space<vmem>>, vector<1x4x256xf32>
    %3 = vector.shape_cast %2 : vector<1x4x256xf32> to vector<4x256xf32>
    %c0_4 = arith.constant 0 : index
    %c128 = arith.constant 128 : index
    %4 = vector.load %arg10[%c0_4, %c128] : memref<8x768xf32, #tpu.memory_space<vmem>>, vector<4x256xf32>
    tpu.vector_store %arg10[%c0_4, %c128], %3 {strides = array<i32>} : memref<8x768xf32, #tpu.memory_space<vmem>>, vector<4x256xf32>,
    %c1 = arith.constant 1 : index
    %c0_5 = arith.constant 0 : index
    %c0_6 = arith.constant 0 : index
    %5 = vector.load %arg1[%c1, %c0_5, %c0_6] : memref<2x4x256xf32, #tpu.memory_space<vmem>>, vector<1x4x256xf32>
    %6 = vector.shape_cast %5 : vector<1x4x256xf32> to vector<4x256xf32>
    %c0_7 = arith.constant 0 : index
    %c384 = arith.constant 384 : index
    %7 = vector.load %arg10[%c0_7, %c384] : memref<8x768xf32, #tpu.memory_space<vmem>>, vector<4x256xf32>
    tpu.vector_store %arg10[%c0_7, %c384], %6 {strides = array<i32>} : memref<8x768xf32, #tpu.memory_space<vmem>>, vector<4x256xf32>,
    %c0_8 = arith.constant 0 : index
    %c128_9 = arith.constant 128 : index
    %8 = vector.load %arg10[%c0_8, %c128_9] : memref<8x768xf32, #tpu.memory_space<vmem>>, vector<8x512xf32>
    %c0_10 = arith.constant 0 : index
    %c111 = arith.constant 111 : index
    %9 = vector.load %arg10[%c0_10, %c111] : memref<8x768xf32, #tpu.memory_space<vmem>>, vector<8x512xf32>
    %c0_11 = arith.constant 0 : index
    %c0_12 = arith.constant 0 : index
    %10 = vector.load %arg2[%c0_11, %c0_12] : memref<9x512xf32, #tpu.memory_space<vmem>>, vector<1x512xf32>
    %11 = vector.broadcast %10 : vector<1x512xf32> to vector<8x512xf32>
    %12 = arith.mulf %9, %11 : vector<8x512xf32>
    %13 = arith.truncf %12 : vector<8x512xf32> to vector<8x512xbf16>
    %c0_13 = arith.constant 0 : index
    %c0_14 = arith.constant 0 : index
    %14 = vector.load %arg11[%c0_13, %c0_14] : memref<72x512xbf16, #tpu.memory_space<vmem>>, vector<8x512xbf16>
    tpu.vector_store %arg11[%c0_13, %c0_14], %13 {strides = array<i32>} : memref<72x512xbf16, #tpu.memory_space<vmem>>, vector<8x512xbf16>,
    %c0_15 = arith.constant 0 : index
    %c112 = arith.constant 112 : index
    %15 = vector.load %arg10[%c0_15, %c112] : memref<8x768xf32, #tpu.memory_space<vmem>>, vector<8x512xf32>
    %c1_16 = arith.constant 1 : index
    %c0_17 = arith.constant 0 : index
    %16 = vector.load %arg2[%c1_16, %c0_17] : memref<9x512xf32, #tpu.memory_space<vmem>>, vector<1x512xf32>
    %17 = vector.broadcast %16 : vector<1x512xf32> to vector<8x512xf32>
    %18 = arith.mulf %15, %17 : vector<8x512xf32>
    %19 = arith.truncf %18 : vector<8x512xf32> to vector<8x512xbf16>
    %c8 = arith.constant 8 : index
    %c0_18 = arith.constant 0 : index
    %20 = vector.load %arg11[%c8, %c0_18] : memref<72x512xbf16, #tpu.memory_space<vmem>>, vector<8x512xbf16>
    tpu.vector_store %arg11[%c8, %c0_18], %19 {strides = array<i32>} : memref<72x512xbf16, #tpu.memory_space<vmem>>, vector<8x512xbf16>,
    %c0_19 = arith.constant 0 : index
    %c113 = arith.constant 113 : index
    %21 = vector.load %arg10[%c0_19, %c113] : memref<8x768xf32, #tpu.memory_space<vmem>>, vector<8x512xf32>
    %c2 = arith.constant 2 : index
    %c0_20 = arith.constant 0 : index
    %22 = vector.load %arg2[%c2, %c0_20] : memref<9x512xf32, #tpu.memory_space<vmem>>, vector<1x512xf32>
    %23 = vector.broadcast %22 : vector<1x512xf32> to vector<8x512xf32>
    %24 = arith.mulf %21, %23 : vector<8x512xf32>
    %25 = arith.truncf %24 : vector<8x512xf32> to vector<8x512xbf16>
    %c16 = arith.constant 16 : index
    %c0_21 = arith.constant 0 : index
    %26 = vector.load %arg11[%c16, %c0_21] : memref<72x512xbf16, #tpu.memory_space<vmem>>, vector<8x512xbf16>
    tpu.vector_store %arg11[%c16, %c0_21], %25 {strides = array<i32>} : memref<72x512xbf16, #tpu.memory_space<vmem>>, vector<8x512xbf16>,
    %c0_22 = arith.constant 0 : index
    %c127 = arith.constant 127 : index
    %27 = vector.load %arg10[%c0_22, %c127] : memref<8x768xf32, #tpu.memory_space<vmem>>, vector<8x512xf32>
    %c3 = arith.constant 3 : index
    %c0_23 = arith.constant 0 : index
    %28 = vector.load %arg2[%c3, %c0_23] : memref<9x512xf32, #tpu.memory_space<vmem>>, vector<1x512xf32>
    %29 = vector.broadcast %28 : vector<1x512xf32> to vector<8x512xf32>
    %30 = arith.mulf %27, %29 : vector<8x512xf32>
    %31 = arith.truncf %30 : vector<8x512xf32> to vector<8x512xbf16>
    %c24 = arith.constant 24 : index
    %c0_24 = arith.constant 0 : index
    %32 = vector.load %arg11[%c24, %c0_24] : memref<72x512xbf16, #tpu.memory_space<vmem>>, vector<8x512xbf16>
    tpu.vector_store %arg11[%c24, %c0_24], %31 {strides = array<i32>} : memref<72x512xbf16, #tpu.memory_space<vmem>>, vector<8x512xbf16>,
    %c0_25 = arith.constant 0 : index
    %c128_26 = arith.constant 128 : index
    %33 = vector.load %arg10[%c0_25, %c128_26] : memref<8x768xf32, #tpu.memory_space<vmem>>, vector<8x512xf32>
    %c4 = arith.constant 4 : index
    %c0_27 = arith.constant 0 : index
    %34 = vector.load %arg2[%c4, %c0_27] : memref<9x512xf32, #tpu.memory_space<vmem>>, vector<1x512xf32>
    %35 = vector.broadcast %34 : vector<1x512xf32> to vector<8x512xf32>
    %36 = arith.mulf %33, %35 : vector<8x512xf32>
    %37 = arith.truncf %36 : vector<8x512xf32> to vector<8x512xbf16>
    %c32 = arith.constant 32 : index
    %c0_28 = arith.constant 0 : index
    %38 = vector.load %arg11[%c32, %c0_28] : memref<72x512xbf16, #tpu.memory_space<vmem>>, vector<8x512xbf16>
    tpu.vector_store %arg11[%c32, %c0_28], %37 {strides = array<i32>} : memref<72x512xbf16, #tpu.memory_space<vmem>>, vector<8x512xbf16>,
    %c0_29 = arith.constant 0 : index
    %c129 = arith.constant 129 : index
    %39 = vector.load %arg10[%c0_29, %c129] : memref<8x768xf32, #tpu.memory_space<vmem>>, vector<8x512xf32>
    %c5 = arith.constant 5 : index
    %c0_30 = arith.constant 0 : index
    %40 = vector.load %arg2[%c5, %c0_30] : memref<9x512xf32, #tpu.memory_space<vmem>>, vector<1x512xf32>
    %41 = vector.broadcast %40 : vector<1x512xf32> to vector<8x512xf32>
    %42 = arith.mulf %39, %41 : vector<8x512xf32>
    %43 = arith.truncf %42 : vector<8x512xf32> to vector<8x512xbf16>
    %c40 = arith.constant 40 : index
    %c0_31 = arith.constant 0 : index
    %44 = vector.load %arg11[%c40, %c0_31] : memref<72x512xbf16, #tpu.memory_space<vmem>>, vector<8x512xbf16>
    tpu.vector_store %arg11[%c40, %c0_31], %43 {strides = array<i32>} : memref<72x512xbf16, #tpu.memory_space<vmem>>, vector<8x512xbf16>,
    %c0_32 = arith.constant 0 : index
    %c143 = arith.constant 143 : index
    %45 = vector.load %arg10[%c0_32, %c143] : memref<8x768xf32, #tpu.memory_space<vmem>>, vector<8x512xf32>
    %c6 = arith.constant 6 : index
    %c0_33 = arith.constant 0 : index
    %46 = vector.load %arg2[%c6, %c0_33] : memref<9x512xf32, #tpu.memory_space<vmem>>, vector<1x512xf32>
    %47 = vector.broadcast %46 : vector<1x512xf32> to vector<8x512xf32>
    %48 = arith.mulf %45, %47 : vector<8x512xf32>
    %49 = arith.truncf %48 : vector<8x512xf32> to vector<8x512xbf16>
    %c48 = arith.constant 48 : index
    %c0_34 = arith.constant 0 : index
    %50 = vector.load %arg11[%c48, %c0_34] : memref<72x512xbf16, #tpu.memory_space<vmem>>, vector<8x512xbf16>
    tpu.vector_store %arg11[%c48, %c0_34], %49 {strides = array<i32>} : memref<72x512xbf16, #tpu.memory_space<vmem>>, vector<8x512xbf16>,
    %c0_35 = arith.constant 0 : index
    %c144 = arith.constant 144 : index
    %51 = vector.load %arg10[%c0_35, %c144] : memref<8x768xf32, #tpu.memory_space<vmem>>, vector<8x512xf32>
    %c7 = arith.constant 7 : index
    %c0_36 = arith.constant 0 : index
    %52 = vector.load %arg2[%c7, %c0_36] : memref<9x512xf32, #tpu.memory_space<vmem>>, vector<1x512xf32>
    %53 = vector.broadcast %52 : vector<1x512xf32> to vector<8x512xf32>
    %54 = arith.mulf %51, %53 : vector<8x512xf32>
    %55 = arith.truncf %54 : vector<8x512xf32> to vector<8x512xbf16>
    %c56 = arith.constant 56 : index
    %c0_37 = arith.constant 0 : index
    %56 = vector.load %arg11[%c56, %c0_37] : memref<72x512xbf16, #tpu.memory_space<vmem>>, vector<8x512xbf16>
    tpu.vector_store %arg11[%c56, %c0_37], %55 {strides = array<i32>} : memref<72x512xbf16, #tpu.memory_space<vmem>>, vector<8x512xbf16>,
    %c0_38 = arith.constant 0 : index
    %c145 = arith.constant 145 : index
    %57 = vector.load %arg10[%c0_38, %c145] : memref<8x768xf32, #tpu.memory_space<vmem>>, vector<8x512xf32>
    %c8_39 = arith.constant 8 : index
    %c0_40 = arith.constant 0 : index
    %58 = vector.load %arg2[%c8_39, %c0_40] : memref<9x512xf32, #tpu.memory_space<vmem>>, vector<1x512xf32>
    %59 = vector.broadcast %58 : vector<1x512xf32> to vector<8x512xf32>
    %60 = arith.mulf %57, %59 : vector<8x512xf32>
    %61 = arith.truncf %60 : vector<8x512xf32> to vector<8x512xbf16>
    %c64 = arith.constant 64 : index
    %c0_41 = arith.constant 0 : index
    %62 = vector.load %arg11[%c64, %c0_41] : memref<72x512xbf16, #tpu.memory_space<vmem>>, vector<8x512xbf16>
    tpu.vector_store %arg11[%c64, %c0_41], %61 {strides = array<i32>} : memref<72x512xbf16, #tpu.memory_space<vmem>>, vector<8x512xbf16>,
    %c0_42 = arith.constant 0 : index
    %c0_43 = arith.constant 0 : index
    %63 = vector.load %arg3[%c0_42, %c0_43] : memref<8x72xbf16, #tpu.memory_space<vmem>>, vector<8x72xbf16>
    %c0_44 = arith.constant 0 : index
    %c0_45 = arith.constant 0 : index
    %64 = vector.load %arg11[%c0_44, %c0_45] : memref<72x512xbf16, #tpu.memory_space<vmem>>, vector<72x512xbf16>
    %cst_46 = arith.constant dense<0.000000e+00> : vector<8x512xf32>
    %65 = tpu.matmul %63, %64, %cst_46 {dimension_numbers = #tpu.dot_dimension_numbers<[1], [0], [0], [1], [0, 0, 1, 1], [], []>} : vector<8x72xbf16>, vector<72x512xbf16>, vector<8x512xf32> -> vector<8x512xf32>
    %cst_47 = arith.constant dense<0.000000e+00> : vector<8xf32>
    %66 = vector.multi_reduction <add>, %65, %cst_47 [1] : vector<8x512xf32> to vector<8xf32>
    %67 = vector.shape_cast %66 : vector<8xf32> to vector<8x1xf32>
    %cst_48 = arith.constant 0.001953125 : f32
    %68 = vector.broadcast %cst_48 : f32 to vector<8x1xf32>
    %69 = arith.mulf %67, %68 : vector<8x1xf32>
    %70 = vector.broadcast %69 : vector<8x1xf32> to vector<8x512xf32>
    %71 = arith.subf %65, %70 : vector<8x512xf32>
    %72 = arith.mulf %71, %71 : vector<8x512xf32>
    %cst_49 = arith.constant dense<0.000000e+00> : vector<8xf32>
    %73 = vector.multi_reduction <add>, %72, %cst_49 [1] : vector<8x512xf32> to vector<8xf32>
    %74 = vector.shape_cast %73 : vector<8xf32> to vector<8x1xf32>
    %cst_50 = arith.constant 0.001953125 : f32
    %75 = vector.broadcast %cst_50 : f32 to vector<8x1xf32>
    %76 = arith.mulf %74, %75 : vector<8x1xf32>
    %cst_51 = arith.constant 9.99999974E-6 : f32
    %77 = vector.broadcast %cst_51 : f32 to vector<8x1xf32>
    %78 = arith.addf %76, %77 : vector<8x1xf32>
    %79 = math.rsqrt %78 : vector<8x1xf32>
    %80 = vector.broadcast %79 : vector<8x1xf32> to vector<8x512xf32>
    %81 = arith.mulf %71, %80 : vector<8x512xf32>
    %c0_52 = arith.constant 0 : index
    %c0_53 = arith.constant 0 : index
    %82 = vector.load %arg4[%c0_52, %c0_53] : memref<8x1xf32, #tpu.memory_space<vmem>>, vector<8x1xf32>
    %83 = vector.broadcast %82 : vector<8x1xf32> to vector<8x512xf32>
    %84 = arith.mulf %81, %83 : vector<8x512xf32>
    %c0_54 = arith.constant 0 : index
    %c0_55 = arith.constant 0 : index
    %85 = vector.load %arg5[%c0_54, %c0_55] : memref<8x1xf32, #tpu.memory_space<vmem>>, vector<8x1xf32>
    %86 = vector.broadcast %85 : vector<8x1xf32> to vector<8x512xf32>
    %87 = arith.addf %84, %86 : vector<8x512xf32>
    %cst_56 = arith.constant 0.000000e+00 : f32
    %88 = vector.broadcast %cst_56 : f32 to vector<8x512xf32>
    %89 = arith.maximumf %87, %88 : vector<8x512xf32>
    %c0_57 = arith.constant 0 : index
    %c128_58 = arith.constant 128 : index
    %90 = vector.load %arg10[%c0_57, %c128_58] : memref<8x768xf32, #tpu.memory_space<vmem>>, vector<8x512xf32>
    tpu.vector_store %arg10[%c0_57, %c128_58], %89 {strides = array<i32>} : memref<8x768xf32, #tpu.memory_space<vmem>>, vector<8x512xf32>,
    %c0_59 = arith.constant 0 : index
    %c111_60 = arith.constant 111 : index
    %91 = vector.load %arg10[%c0_59, %c111_60] : memref<8x768xf32, #tpu.memory_space<vmem>>, vector<8x512xf32>
    %c0_61 = arith.constant 0 : index
    %c0_62 = arith.constant 0 : index
    %92 = vector.load %arg2[%c0_61, %c0_62] : memref<9x512xf32, #tpu.memory_space<vmem>>, vector<1x512xf32>
    %93 = vector.broadcast %92 : vector<1x512xf32> to vector<8x512xf32>
    %94 = arith.mulf %91, %93 : vector<8x512xf32>
    %95 = arith.truncf %94 : vector<8x512xf32> to vector<8x512xbf16>
    %c0_63 = arith.constant 0 : index
    %c0_64 = arith.constant 0 : index
    %96 = vector.load %arg11[%c0_63, %c0_64] : memref<72x512xbf16, #tpu.memory_space<vmem>>, vector<8x512xbf16>
    tpu.vector_store %arg11[%c0_63, %c0_64], %95 {strides = array<i32>} : memref<72x512xbf16, #tpu.memory_space<vmem>>, vector<8x512xbf16>,
    %c0_65 = arith.constant 0 : index
    %c112_66 = arith.constant 112 : index
    %97 = vector.load %arg10[%c0_65, %c112_66] : memref<8x768xf32, #tpu.memory_space<vmem>>, vector<8x512xf32>
    %c1_67 = arith.constant 1 : index
    %c0_68 = arith.constant 0 : index
    %98 = vector.load %arg2[%c1_67, %c0_68] : memref<9x512xf32, #tpu.memory_space<vmem>>, vector<1x512xf32>
    %99 = vector.broadcast %98 : vector<1x512xf32> to vector<8x512xf32>
    %100 = arith.mulf %97, %99 : vector<8x512xf32>
    %101 = arith.truncf %100 : vector<8x512xf32> to vector<8x512xbf16>
    %c8_69 = arith.constant 8 : index
    %c0_70 = arith.constant 0 : index
    %102 = vector.load %arg11[%c8_69, %c0_70] : memref<72x512xbf16, #tpu.memory_space<vmem>>, vector<8x512xbf16>
    tpu.vector_store %arg11[%c8_69, %c0_70], %101 {strides = array<i32>} : memref<72x512xbf16, #tpu.memory_space<vmem>>, vector<8x512xbf16>,
    %c0_71 = arith.constant 0 : index
    %c113_72 = arith.constant 113 : index
    %103 = vector.load %arg10[%c0_71, %c113_72] : memref<8x768xf32, #tpu.memory_space<vmem>>, vector<8x512xf32>
    %c2_73 = arith.constant 2 : index
    %c0_74 = arith.constant 0 : index
    %104 = vector.load %arg2[%c2_73, %c0_74] : memref<9x512xf32, #tpu.memory_space<vmem>>, vector<1x512xf32>
    %105 = vector.broadcast %104 : vector<1x512xf32> to vector<8x512xf32>
    %106 = arith.mulf %103, %105 : vector<8x512xf32>
    %107 = arith.truncf %106 : vector<8x512xf32> to vector<8x512xbf16>
    %c16_75 = arith.constant 16 : index
    %c0_76 = arith.constant 0 : index
    %108 = vector.load %arg11[%c16_75, %c0_76] : memref<72x512xbf16, #tpu.memory_space<vmem>>, vector<8x512xbf16>
    tpu.vector_store %arg11[%c16_75, %c0_76], %107 {strides = array<i32>} : memref<72x512xbf16, #tpu.memory_space<vmem>>, vector<8x512xbf16>,
    %c0_77 = arith.constant 0 : index
    %c127_78 = arith.constant 127 : index
    %109 = vector.load %arg10[%c0_77, %c127_78] : memref<8x768xf32, #tpu.memory_space<vmem>>, vector<8x512xf32>
    %c3_79 = arith.constant 3 : index
    %c0_80 = arith.constant 0 : index
    %110 = vector.load %arg2[%c3_79, %c0_80] : memref<9x512xf32, #tpu.memory_space<vmem>>, vector<1x512xf32>
    %111 = vector.broadcast %110 : vector<1x512xf32> to vector<8x512xf32>
    %112 = arith.mulf %109, %111 : vector<8x512xf32>
    %113 = arith.truncf %112 : vector<8x512xf32> to vector<8x512xbf16>
    %c24_81 = arith.constant 24 : index
    %c0_82 = arith.constant 0 : index
    %114 = vector.load %arg11[%c24_81, %c0_82] : memref<72x512xbf16, #tpu.memory_space<vmem>>, vector<8x512xbf16>
    tpu.vector_store %arg11[%c24_81, %c0_82], %113 {strides = array<i32>} : memref<72x512xbf16, #tpu.memory_space<vmem>>, vector<8x512xbf16>,
    %c0_83 = arith.constant 0 : index
    %c128_84 = arith.constant 128 : index
    %115 = vector.load %arg10[%c0_83, %c128_84] : memref<8x768xf32, #tpu.memory_space<vmem>>, vector<8x512xf32>
    %c4_85 = arith.constant 4 : index
    %c0_86 = arith.constant 0 : index
    %116 = vector.load %arg2[%c4_85, %c0_86] : memref<9x512xf32, #tpu.memory_space<vmem>>, vector<1x512xf32>
    %117 = vector.broadcast %116 : vector<1x512xf32> to vector<8x512xf32>
    %118 = arith.mulf %115, %117 : vector<8x512xf32>
    %119 = arith.truncf %118 : vector<8x512xf32> to vector<8x512xbf16>
    %c32_87 = arith.constant 32 : index
    %c0_88 = arith.constant 0 : index
    %120 = vector.load %arg11[%c32_87, %c0_88] : memref<72x512xbf16, #tpu.memory_space<vmem>>, vector<8x512xbf16>
    tpu.vector_store %arg11[%c32_87, %c0_88], %119 {strides = array<i32>} : memref<72x512xbf16, #tpu.memory_space<vmem>>, vector<8x512xbf16>,
    %c0_89 = arith.constant 0 : index
    %c129_90 = arith.constant 129 : index
    %121 = vector.load %arg10[%c0_89, %c129_90] : memref<8x768xf32, #tpu.memory_space<vmem>>, vector<8x512xf32>
    %c5_91 = arith.constant 5 : index
    %c0_92 = arith.constant 0 : index
    %122 = vector.load %arg2[%c5_91, %c0_92] : memref<9x512xf32, #tpu.memory_space<vmem>>, vector<1x512xf32>
    %123 = vector.broadcast %122 : vector<1x512xf32> to vector<8x512xf32>
    %124 = arith.mulf %121, %123 : vector<8x512xf32>
    %125 = arith.truncf %124 : vector<8x512xf32> to vector<8x512xbf16>
    %c40_93 = arith.constant 40 : index
    %c0_94 = arith.constant 0 : index
    %126 = vector.load %arg11[%c40_93, %c0_94] : memref<72x512xbf16, #tpu.memory_space<vmem>>, vector<8x512xbf16>
    tpu.vector_store %arg11[%c40_93, %c0_94], %125 {strides = array<i32>} : memref<72x512xbf16, #tpu.memory_space<vmem>>, vector<8x512xbf16>,
    %c0_95 = arith.constant 0 : index
    %c143_96 = arith.constant 143 : index
    %127 = vector.load %arg10[%c0_95, %c143_96] : memref<8x768xf32, #tpu.memory_space<vmem>>, vector<8x512xf32>
    %c6_97 = arith.constant 6 : index
    %c0_98 = arith.constant 0 : index
    %128 = vector.load %arg2[%c6_97, %c0_98] : memref<9x512xf32, #tpu.memory_space<vmem>>, vector<1x512xf32>
    %129 = vector.broadcast %128 : vector<1x512xf32> to vector<8x512xf32>
    %130 = arith.mulf %127, %129 : vector<8x512xf32>
    %131 = arith.truncf %130 : vector<8x512xf32> to vector<8x512xbf16>
    %c48_99 = arith.constant 48 : index
    %c0_100 = arith.constant 0 : index
    %132 = vector.load %arg11[%c48_99, %c0_100] : memref<72x512xbf16, #tpu.memory_space<vmem>>, vector<8x512xbf16>
    tpu.vector_store %arg11[%c48_99, %c0_100], %131 {strides = array<i32>} : memref<72x512xbf16, #tpu.memory_space<vmem>>, vector<8x512xbf16>,
    %c0_101 = arith.constant 0 : index
    %c144_102 = arith.constant 144 : index
    %133 = vector.load %arg10[%c0_101, %c144_102] : memref<8x768xf32, #tpu.memory_space<vmem>>, vector<8x512xf32>
    %c7_103 = arith.constant 7 : index
    %c0_104 = arith.constant 0 : index
    %134 = vector.load %arg2[%c7_103, %c0_104] : memref<9x512xf32, #tpu.memory_space<vmem>>, vector<1x512xf32>
    %135 = vector.broadcast %134 : vector<1x512xf32> to vector<8x512xf32>
    %136 = arith.mulf %133, %135 : vector<8x512xf32>
    %137 = arith.truncf %136 : vector<8x512xf32> to vector<8x512xbf16>
    %c56_105 = arith.constant 56 : index
    %c0_106 = arith.constant 0 : index
    %138 = vector.load %arg11[%c56_105, %c0_106] : memref<72x512xbf16, #tpu.memory_space<vmem>>, vector<8x512xbf16>
    tpu.vector_store %arg11[%c56_105, %c0_106], %137 {strides = array<i32>} : memref<72x512xbf16, #tpu.memory_space<vmem>>, vector<8x512xbf16>,
    %c0_107 = arith.constant 0 : index
    %c145_108 = arith.constant 145 : index
    %139 = vector.load %arg10[%c0_107, %c145_108] : memref<8x768xf32, #tpu.memory_space<vmem>>, vector<8x512xf32>
    %c8_109 = arith.constant 8 : index
    %c0_110 = arith.constant 0 : index
    %140 = vector.load %arg2[%c8_109, %c0_110] : memref<9x512xf32, #tpu.memory_space<vmem>>, vector<1x512xf32>
    %141 = vector.broadcast %140 : vector<1x512xf32> to vector<8x512xf32>
    %142 = arith.mulf %139, %141 : vector<8x512xf32>
    %143 = arith.truncf %142 : vector<8x512xf32> to vector<8x512xbf16>
    %c64_111 = arith.constant 64 : index
    %c0_112 = arith.constant 0 : index
    %144 = vector.load %arg11[%c64_111, %c0_112] : memref<72x512xbf16, #tpu.memory_space<vmem>>, vector<8x512xbf16>
    tpu.vector_store %arg11[%c64_111, %c0_112], %143 {strides = array<i32>} : memref<72x512xbf16, #tpu.memory_space<vmem>>, vector<8x512xbf16>,
    %c0_113 = arith.constant 0 : index
    %c0_114 = arith.constant 0 : index
    %145 = vector.load %arg6[%c0_113, %c0_114] : memref<8x72xbf16, #tpu.memory_space<vmem>>, vector<8x72xbf16>
    %c0_115 = arith.constant 0 : index
    %c0_116 = arith.constant 0 : index
    %146 = vector.load %arg11[%c0_115, %c0_116] : memref<72x512xbf16, #tpu.memory_space<vmem>>, vector<72x512xbf16>
    %cst_117 = arith.constant dense<0.000000e+00> : vector<8x512xf32>
    %147 = tpu.matmul %145, %146, %cst_117 {dimension_numbers = #tpu.dot_dimension_numbers<[1], [0], [0], [1], [0, 0, 1, 1], [], []>} : vector<8x72xbf16>, vector<72x512xbf16>, vector<8x512xf32> -> vector<8x512xf32>
    %cst_118 = arith.constant dense<0.000000e+00> : vector<8xf32>
    %148 = vector.multi_reduction <add>, %147, %cst_118 [1] : vector<8x512xf32> to vector<8xf32>
    %149 = vector.shape_cast %148 : vector<8xf32> to vector<8x1xf32>
    %cst_119 = arith.constant 0.001953125 : f32
    %150 = vector.broadcast %cst_119 : f32 to vector<8x1xf32>
    %151 = arith.mulf %149, %150 : vector<8x1xf32>
    %152 = vector.broadcast %151 : vector<8x1xf32> to vector<8x512xf32>
    %153 = arith.subf %147, %152 : vector<8x512xf32>
    %154 = arith.mulf %153, %153 : vector<8x512xf32>
    %cst_120 = arith.constant dense<0.000000e+00> : vector<8xf32>
    %155 = vector.multi_reduction <add>, %154, %cst_120 [1] : vector<8x512xf32> to vector<8xf32>
    %156 = vector.shape_cast %155 : vector<8xf32> to vector<8x1xf32>
    %cst_121 = arith.constant 0.001953125 : f32
    %157 = vector.broadcast %cst_121 : f32 to vector<8x1xf32>
    %158 = arith.mulf %156, %157 : vector<8x1xf32>
    %cst_122 = arith.constant 9.99999974E-6 : f32
    %159 = vector.broadcast %cst_122 : f32 to vector<8x1xf32>
    %160 = arith.addf %158, %159 : vector<8x1xf32>
    %161 = math.rsqrt %160 : vector<8x1xf32>
    %162 = vector.broadcast %161 : vector<8x1xf32> to vector<8x512xf32>
    %163 = arith.mulf %153, %162 : vector<8x512xf32>
    %c0_123 = arith.constant 0 : index
    %c0_124 = arith.constant 0 : index
    %164 = vector.load %arg7[%c0_123, %c0_124] : memref<8x1xf32, #tpu.memory_space<vmem>>, vector<8x1xf32>
    %165 = vector.broadcast %164 : vector<8x1xf32> to vector<8x512xf32>
    %166 = arith.mulf %163, %165 : vector<8x512xf32>
    %c0_125 = arith.constant 0 : index
    %c0_126 = arith.constant 0 : index
    %167 = vector.load %arg8[%c0_125, %c0_126] : memref<8x1xf32, #tpu.memory_space<vmem>>, vector<8x1xf32>
    %168 = vector.broadcast %167 : vector<8x1xf32> to vector<8x512xf32>
    %169 = arith.addf %166, %168 : vector<8x512xf32>
    %170 = arith.addf %169, %8 : vector<8x512xf32>
    %cst_127 = arith.constant 0.000000e+00 : f32
    %171 = vector.broadcast %cst_127 : f32 to vector<8x512xf32>
    %172 = arith.maximumf %170, %171 : vector<8x512xf32>
    %173 = vector.extract_strided_slice %172 {offsets = [0, 0], sizes = [4, 256], strides = [1, 1]} : vector<8x512xf32> to vector<4x256xf32>
    %c0_128 = arith.constant 0 : index
    %c0_129 = arith.constant 0 : index
    %c0_130 = arith.constant 0 : index
    %174 = vector.load %arg9[%c0_128, %c0_129, %c0_130] : memref<2x4x256xf32, #tpu.memory_space<vmem>>, vector<1x4x256xf32>
    %175 = vector.shape_cast %174 : vector<1x4x256xf32> to vector<4x256xf32>
    %176 = vector.shape_cast %173 : vector<4x256xf32> to vector<1x4x256xf32>
    tpu.vector_store %arg9[%c0_128, %c0_129, %c0_130], %176 {strides = array<i32>} : memref<2x4x256xf32, #tpu.memory_space<vmem>>, vector<1x4x256xf32>,
    %177 = vector.extract_strided_slice %172 {offsets = [0, 256], sizes = [4, 256], strides = [1, 1]} : vector<8x512xf32> to vector<4x256xf32>
    %c1_131 = arith.constant 1 : index
    %c0_132 = arith.constant 0 : index
    %c0_133 = arith.constant 0 : index
    %178 = vector.load %arg9[%c1_131, %c0_132, %c0_133] : memref<2x4x256xf32, #tpu.memory_space<vmem>>, vector<1x4x256xf32>
    %179 = vector.shape_cast %178 : vector<1x4x256xf32> to vector<4x256xf32>
    %180 = vector.shape_cast %177 : vector<4x256xf32> to vector<1x4x256xf32>
    tpu.vector_store %arg9[%c1_131, %c0_132, %c0_133], %180 {strides = array<i32>} : memref<2x4x256xf32, #tpu.memory_space<vmem>>, vector<1x4x256xf32>,
    return
  }
  func.func @transform_0(%arg0: i32) -> (i32, i32, i32) {
    %c0_i32 = arith.constant 0 : i32
    %c0_i32_0 = arith.constant 0 : i32
    %c0_i32_1 = arith.constant 0 : i32
    %c0_i32_2 = arith.constant 0 : i32
    return %c0_i32, %c0_i32_0, %c0_i32_1 : i32, i32, i32
  }
  func.func @transform_1(%arg0: i32) -> (i32, i32) {
    %c0_i32 = arith.constant 0 : i32
    %c0_i32_0 = arith.constant 0 : i32
    %c0_i32_1 = arith.constant 0 : i32
    return %c0_i32, %c0_i32_0 : i32, i32
  }
  func.func @transform_2(%arg0: i32) -> (i32, i32) {
    %c0_i32 = arith.constant 0 : i32
    %c0_i32_0 = arith.constant 0 : i32
    %c0_i32_1 = arith.constant 0 : i32
    return %c0_i32, %c0_i32_0 : i32, i32
  }
  func.func @transform_3(%arg0: i32) -> (i32, i32) {
    %c0_i32 = arith.constant 0 : i32
    %c0_i32_0 = arith.constant 0 : i32
    %c0_i32_1 = arith.constant 0 : i32
    return %c0_i32, %c0_i32_0 : i32, i32
  }
  func.func @transform_4(%arg0: i32) -> (i32, i32) {
    %c0_i32 = arith.constant 0 : i32
    %c0_i32_0 = arith.constant 0 : i32
    %c0_i32_1 = arith.constant 0 : i32
    return %c0_i32, %c0_i32_0 : i32, i32
  }
  func.func @transform_5(%arg0: i32) -> (i32, i32) {
    %c0_i32 = arith.constant 0 : i32
    %c0_i32_0 = arith.constant 0 : i32
    %c0_i32_1 = arith.constant 0 : i32
    return %c0_i32, %c0_i32_0 : i32, i32
  }
  func.func @transform_6(%arg0: i32) -> (i32, i32) {
    %c0_i32 = arith.constant 0 : i32
    %c0_i32_0 = arith.constant 0 : i32
    %c0_i32_1 = arith.constant 0 : i32
    return %c0_i32, %c0_i32_0 : i32, i32
  }
  func.func @transform_7(%arg0: i32) -> (i32, i32) {
    %c0_i32 = arith.constant 0 : i32
    %c0_i32_0 = arith.constant 0 : i32
    %c0_i32_1 = arith.constant 0 : i32
    return %c0_i32, %c0_i32_0 : i32, i32
  }
  func.func @transform_8(%arg0: i32) -> (i32, i32, i32) {
    %c0_i32 = arith.constant 0 : i32
    %c0_i32_0 = arith.constant 0 : i32
    %c0_i32_1 = arith.constant 0 : i32
    %c0_i32_2 = arith.constant 0 : i32
    return %c0_i32, %c0_i32_0, %c0_i32_1 : i32, i32, i32
  }
}

</mosaic_0001>

<llo_original>
// kernel: tpu_custom_call.1
$region0: #{tpu_custom_call.1}
  #allocation0 [shape = 'u32[]', space=smem, size = 0x4, offset = 0x4, fixed_abs, tag = 'smem constant byte address 0x4 - core index']
  #allocation1 [shape = 'u32[144,128]{1,0:T(1,128)}', space=vmem, size = 0x12000, scoped, tag = 'internal scratch']
  #allocation2 [shape = 'f32[8,768]{1,0:T(8,128)}', space=vmem, size = 0x6000, scoped, tag = 'scratch operand']
  #allocation3 [shape = 'bf16[72,512]{1,0:T(8,128)(2,1)}', space=vmem, size = 0x12000, scoped, tag = 'scratch operand']
  %s0 = inlined_call_operand.vmem [shape: f32[2,4,256], index: 0, kind: input, shape index: {}]
  %s1 = inlined_call_operand.hbm [shape: f32[9,512], index: 1, kind: input, shape index: {}]
  %s2 = inlined_call_operand.vmem [shape: bf16[8,72], index: 2, kind: input, shape index: {}]
  %s3 = inlined_call_operand.vmem [shape: f32[8,1], index: 3, kind: input, shape index: {}]
  %s4 = inlined_call_operand.vmem [shape: f32[8,1], index: 4, kind: input, shape index: {}]
  %s5 = inlined_call_operand.vmem [shape: bf16[8,72], index: 5, kind: input, shape index: {}]
  %s6 = inlined_call_operand.vmem [shape: f32[8,1], index: 6, kind: input, shape index: {}]
  %s7 = inlined_call_operand.vmem [shape: f32[8,1], index: 7, kind: input, shape index: {}]
  %s8 = inlined_call_operand.hbm [shape: f32[2,4,256], index: 8, kind: output, shape index: {}]
  %s9 = sld [smem:[#allocation0]]
  $region46: #{tpu_custom_call.1} parent=0
    _
  %s11 = ssub.s32 1, %s9
  %s12 = scalar_select 0, %s11, %s9
  $region1: #{tpu_custom_call.1} parent=0
    #allocation4 [shape = 'u8[32768]{0}', space=vmem, size = 0x8000, scoped, tag = 'input window, operand 1, single buffered']
    #allocation5 [shape = 's32[1]{0}', space=sflag, size = 0x4, scoped, tag = 'scoped memory for tpu_custom_call.1']
    #allocation6 [shape = 's32[1]{0}', space=sflag, size = 0x4, scoped, tag = 'scoped memory for tpu_custom_call.1']
    #allocation7 [shape = 'u8[8192]{0}', space=vmem, size = 0x2000, scoped, tag = 'output window, operand 0, single buffered']
    %13 = vsyncpa [#allocation5], 0
    %14 = vsyncpa [#allocation6], 0
    // Predicated region
    $region2: #{tpu_custom_call.1} parent=1 // pred_check
      _
    $region3: #{tpu_custom_call.1} parent=1 // pred_check_branch
      %16 = sbr.rel (0) target = $region5
    $region4: #{tpu_custom_call.1} parent=1 // pred_region
      _
    $region5: #{tpu_custom_call.1} parent=1 // pred_fallthru
      _
    // Predicated region
    $region6: #{tpu_custom_call.1} parent=1 // pred_check
      _
    $region7: #{tpu_custom_call.1} parent=1 // pred_check_branch
      %18 = sbr.rel (0) target = $region9
    $region8: #{tpu_custom_call.1} parent=1 // pred_region
      %s20 = ssub.s32 1024, 1024
      %21 = vsyncadd [#allocation5], %s20
      %s22 = sshll.u32 [#allocation4], 4
      %s23 = int_to_ptr.vmem [resolvable:$true] %s22
      %28 = dma.hbm_to_vmem [thread:$0]  %s1, 1024, %s23, [#allocation5], 512, 512, 32
    $region9: #{tpu_custom_call.1} parent=1 // pred_fallthru
      _
    // Predicated region
    $region10: #{tpu_custom_call.1} parent=1 // pred_check
      _
    $region11: #{tpu_custom_call.1} parent=1 // pred_check_branch
      %30 = sbr.rel (0) target = $region13
    $region12: #{tpu_custom_call.1} parent=1 // pred_region
      _
    $region13: #{tpu_custom_call.1} parent=1 // pred_fallthru
      _
    // Predicated region
    $region14: #{tpu_custom_call.1} parent=1 // pred_check
      _
    $region15: #{tpu_custom_call.1} parent=1 // pred_check_branch
      %32 = sbr.rel (0) target = $region17
    $region16: #{tpu_custom_call.1} parent=1 // pred_region
      _
    $region17: #{tpu_custom_call.1} parent=1 // pred_fallthru
      _
    // Predicated region
    $region18: #{tpu_custom_call.1} parent=1 // pred_check
      _
    $region19: #{tpu_custom_call.1} parent=1 // pred_check_branch
      %34 = sbr.rel (0) target = $region21
    $region20: #{tpu_custom_call.1} parent=1 // pred_region
      _
    $region21: #{tpu_custom_call.1} parent=1 // pred_fallthru
      _
    // Predicated region
    $region22: #{tpu_custom_call.1} parent=1 // pred_check
      _
    $region23: #{tpu_custom_call.1} parent=1 // pred_check_branch
      %36 = sbr.rel (0) target = $region25
    $region24: #{tpu_custom_call.1} parent=1 // pred_region
      _
    $region25: #{tpu_custom_call.1} parent=1 // pred_fallthru
      _
    // Predicated region
    $region26: #{tpu_custom_call.1} parent=1 // pred_check
      _
    $region27: #{tpu_custom_call.1} parent=1 // pred_check_branch
      %38 = sbr.rel (0) target = $region29
    $region28: #{tpu_custom_call.1} parent=1 // pred_region
      _
    $region29: #{tpu_custom_call.1} parent=1 // pred_fallthru
      _
    // Predicated region
    $region30: #{tpu_custom_call.1} parent=1 // pred_check
      _
    $region31: #{tpu_custom_call.1} parent=1 // pred_check_branch
      %40 = sbr.rel (0) target = $region33
    $region32: #{tpu_custom_call.1} parent=1 // pred_region
      _
    $region33: #{tpu_custom_call.1} parent=1 // pred_fallthru
      _
    // Predicated region
    $region34: #{tpu_custom_call.1} parent=1 // pred_check
      _
    $region35: #{tpu_custom_call.1} parent=1 // pred_check_branch
      %42 = sbr.rel (0) target = $region37
    $region36: #{tpu_custom_call.1} parent=1 // pred_region
      %43 = dma.done [#allocation5], 1024
    $region37: #{tpu_custom_call.1} parent=1 // pred_fallthru
      _
    %45 = vst [vmem:[#allocation2] sm:$0xff] 0.0
    %46 = vst [vmem:[#allocation2 + $0x8] sm:$0xff] 0.0
    %47 = vst [vmem:[#allocation2 + $0x10] sm:$0xff] 0.0
    %48 = vst [vmem:[#allocation2 + $0x18] sm:$0xff] 0.0
    %49 = vst [vmem:[#allocation2 + $0x20] sm:$0xff] 0.0
    %50 = vst [vmem:[#allocation2 + $0x28] sm:$0xff] 0.0
    %v51 = vld [vmem:[%s0] sm:$0xff]
    %v53 = vcombine.high %v51, %v51
    %55 = vst [vmem:[#allocation2 + $0x8] sm:$0xf] %v51
    %56 = vst [vmem:[#allocation2 + $0x10] sm:$0xf] %v53
    %s57 = scalar_lea.vmem %s0, 8
    %v58 = vld [vmem:[%s57] sm:$0xff]
    %v60 = vcombine.high %v58, %v58
    %62 = vst [vmem:[#allocation2 + $0x18] sm:$0xf] %v58
    %63 = vst [vmem:[#allocation2 + $0x20] sm:$0xf] %v60
    %v64 = vld [vmem:[#allocation2 + $0x8] sm:$0xff]
    %v65 = vld [vmem:[#allocation2 + $0x10] sm:$0xff]
    %v66 = vld [vmem:[#allocation2 + $0x18] sm:$0xff]
    %v67 = vld [vmem:[#allocation2 + $0x20] sm:$0xff]
    %v68 = vld [vmem:[#allocation2] sm:$0xff]
    %v69 = vld [vmem:[#allocation4] ss:$8 sm:$0xf]
    %v71 = vlaneseq
    %v72 = vshrl.u32 %v71, 7
    %v73 = vsub.s32 0, %v72
    %v74 = vrot.slane %v69, %v73
    %v75 = vlaneseq
    %v76 = vshrl.u32 %v75, 7
    %v77 = vsub.s32 1, %v76
    %v78 = vrot.slane %v69, %v77
    %v79 = vlaneseq
    %v80 = vshrl.u32 %v79, 7
    %v81 = vsub.s32 2, %v80
    %v82 = vrot.slane %v69, %v81
    %v83 = vlaneseq
    %v84 = vshrl.u32 %v83, 7
    %v85 = vsub.s32 3, %v84
    %v86 = vrot.slane %v69, %v85
    %87 = vrot.lane.b32.xlu0 %v74, 111
    %v88 = vpop.permute.xlu0 %87
    %89 = vrot.lane.b32.xlu0 %v78, 111
    %v90 = vpop.permute.xlu0 %89
    %91 = vrot.lane.b32.xlu0 %v82, 111
    %v92 = vpop.permute.xlu0 %91
    %93 = vrot.lane.b32.xlu0 %v86, 111
    %v94 = vpop.permute.xlu0 %93
    %vm95 = vcmask 908288
    %v96 = vsel %vm95, %v88, %v90
    %v97 = vsel %vm95, %v90, %v92
    %v98 = vsel %vm95, %v92, %v94
    %v104 = vmul.f32 %v68, %v88
    %v105 = vmul.f32 %v64, %v96
    %v106 = vmul.f32 %v65, %v97
    %v107 = vmul.f32 %v66, %v98
    %v108 = vmul.f32 %v67, %v94
    %v109 = vpack.c.bf16 %v104, %v104
    %v110 = vpack.c.bf16 %v105, %v105
    %v111 = vpack.c.bf16 %v106, %v106
    %v112 = vpack.c.bf16 %v107, %v107
    %v113 = vpack.c.bf16 %v108, %v108
    %v119 = vunpack.c.l.b16 %v109
    %v120 = vunpack.c.l.b16 %v110
    %v121 = vunpack.c.l.b16 %v111
    %v122 = vunpack.c.l.b16 %v112
    %v123 = vunpack.c.l.b16 %v113
    %v124 = vpack.c.b16 %v120, %v119
    %v125 = vpack.c.b16 %v122, %v121
    %v126 = vpack.c.b16 %v123, %v123
    %127 = vrot.lane.b32.xlu0 %v124, 17
    %v128 = vpop.permute.xlu0 %127
    %129 = vrot.lane.b32.xlu0 %v125, 17
    %v130 = vpop.permute.xlu0 %129
    %131 = vrot.lane.b32.xlu0 %v126, 17
    %v132 = vpop.permute.xlu0 %131
    %v133 = vrot.slane %v128, 4
    %v134 = vrot.slane %v130, 4
    %v135 = vrot.slane %v132, 4
    %vm136 = vcmask 1043456
    %v137 = vsel %vm136, %v133, %v134
    %vm138 = vcmask 138240
    %v139 = vsel %vm138, %v128, %v137
    %v140 = vsel %vm136, %v134, %v135
    %v141 = vsel %vm138, %v130, %v140
    %144 = vst [vmem:[#allocation3] sm:$0xff] %v139
    %145 = vst [vmem:[#allocation3 + $0x8] sm:$0xff] %v141
    %v146 = vld [vmem:[#allocation2] sm:$0xff]
    %v147 = vld [vmem:[#allocation2 + $0x8] sm:$0xff]
    %v148 = vld [vmem:[#allocation2 + $0x10] sm:$0xff]
    %v149 = vld [vmem:[#allocation2 + $0x18] sm:$0xff]
    %v150 = vld [vmem:[#allocation2 + $0x20] sm:$0xff]
    %s151 = scalar_lea.vmem [#allocation4], 1
    %v152 = vld [vmem:[%s151] ss:$8 sm:$0xf]
    %v154 = vlaneseq
    %v155 = vshrl.u32 %v154, 7
    %v156 = vsub.s32 0, %v155
    %v157 = vrot.slane %v152, %v156
    %v158 = vlaneseq
    %v159 = vshrl.u32 %v158, 7
    %v160 = vsub.s32 1, %v159
    %v161 = vrot.slane %v152, %v160
    %v162 = vlaneseq
    %v163 = vshrl.u32 %v162, 7
    %v164 = vsub.s32 2, %v163
    %v165 = vrot.slane %v152, %v164
    %v166 = vlaneseq
    %v167 = vshrl.u32 %v166, 7
    %v168 = vsub.s32 3, %v167
    %v169 = vrot.slane %v152, %v168
    %170 = vrot.lane.b32.xlu0 %v157, 112
    %v171 = vpop.permute.xlu0 %170
    %172 = vrot.lane.b32.xlu0 %v161, 112
    %v173 = vpop.permute.xlu0 %172
    %174 = vrot.lane.b32.xlu0 %v165, 112
    %v175 = vpop.permute.xlu0 %174
    %176 = vrot.lane.b32.xlu0 %v169, 112
    %v177 = vpop.permute.xlu0 %176
    %vm178 = vcmask 916480
    %v179 = vsel %vm178, %v171, %v173
    %v180 = vsel %vm178, %v173, %v175
    %v181 = vsel %vm178, %v175, %v177
    %v187 = vmul.f32 %v146, %v171
    %v188 = vmul.f32 %v147, %v179
    %v189 = vmul.f32 %v148, %v180
    %v190 = vmul.f32 %v149, %v181
    %v191 = vmul.f32 %v150, %v177
    %v192 = vpack.c.bf16 %v187, %v187
    %v193 = vpack.c.bf16 %v188, %v188
    %v194 = vpack.c.bf16 %v189, %v189
    %v195 = vpack.c.bf16 %v190, %v190
    %v196 = vpack.c.bf16 %v191, %v191
    %v202 = vunpack.c.l.b16 %v192
    %v203 = vunpack.c.l.b16 %v193
    %v204 = vunpack.c.l.b16 %v194
    %v205 = vunpack.c.l.b16 %v195
    %v206 = vunpack.c.l.b16 %v196
    %v207 = vpack.c.b16 %v203, %v202
    %v208 = vpack.c.b16 %v205, %v204
    %v209 = vpack.c.b16 %v206, %v206
    %210 = vrot.lane.b32.xlu0 %v207, 16
    %v211 = vpop.permute.xlu0 %210
    %212 = vrot.lane.b32.xlu0 %v208, 16
    %v213 = vpop.permute.xlu0 %212
    %214 = vrot.lane.b32.xlu0 %v209, 16
    %v215 = vpop.permute.xlu0 %214
    %v216 = vrot.slane %v211, 4
    %v217 = vrot.slane %v213, 4
    %v218 = vrot.slane %v215, 4
    %v219 = vsel %vm136, %v216, %v217
    %vm220 = vcmask 130048
    %v221 = vsel %vm220, %v211, %v219
    %v222 = vsel %vm136, %v217, %v218
    %v223 = vsel %vm220, %v213, %v222
    %226 = vst [vmem:[#allocation3 + $0x10] sm:$0xff] %v221
    %227 = vst [vmem:[#allocation3 + $0x18] sm:$0xff] %v223
    %v228 = vld [vmem:[#allocation2] sm:$0xff]
    %v229 = vld [vmem:[#allocation2 + $0x8] sm:$0xff]
    %v230 = vld [vmem:[#allocation2 + $0x10] sm:$0xff]
    %v231 = vld [vmem:[#allocation2 + $0x18] sm:$0xff]
    %v232 = vld [vmem:[#allocation2 + $0x20] sm:$0xff]
    %s233 = scalar_lea.vmem [#allocation4], 2
    %v234 = vld [vmem:[%s233] ss:$8 sm:$0xf]
    %v236 = vlaneseq
    %v237 = vshrl.u32 %v236, 7
    %v238 = vsub.s32 0, %v237
    %v239 = vrot.slane %v234, %v238
    %v240 = vlaneseq
    %v241 = vshrl.u32 %v240, 7
    %v242 = vsub.s32 1, %v241
    %v243 = vrot.slane %v234, %v242
    %v244 = vlaneseq
    %v245 = vshrl.u32 %v244, 7
    %v246 = vsub.s32 2, %v245
    %v247 = vrot.slane %v234, %v246
    %v248 = vlaneseq
    %v249 = vshrl.u32 %v248, 7
    %v250 = vsub.s32 3, %v249
    %v251 = vrot.slane %v234, %v250
    %252 = vrot.lane.b32.xlu0 %v239, 113
    %v253 = vpop.permute.xlu0 %252
    %254 = vrot.lane.b32.xlu0 %v243, 113
    %v255 = vpop.permute.xlu0 %254
    %256 = vrot.lane.b32.xlu0 %v247, 113
    %v257 = vpop.permute.xlu0 %256
    %258 = vrot.lane.b32.xlu0 %v251, 113
    %v259 = vpop.permute.xlu0 %258
    %vm260 = vcmask 924672
    %v261 = vsel %vm260, %v253, %v255
    %v262 = vsel %vm260, %v255, %v257
    %v263 = vsel %vm260, %v257, %v259
    %v269 = vmul.f32 %v228, %v253
    %v270 = vmul.f32 %v229, %v261
    %v271 = vmul.f32 %v230, %v262
    %v272 = vmul.f32 %v231, %v263
    %v273 = vmul.f32 %v232, %v259
    %v274 = vpack.c.bf16 %v269, %v269
    %v275 = vpack.c.bf16 %v270, %v270
    %v276 = vpack.c.bf16 %v271, %v271
    %v277 = vpack.c.bf16 %v272, %v272
    %v278 = vpack.c.bf16 %v273, %v273
    %v284 = vunpack.c.l.b16 %v274
    %v285 = vunpack.c.l.b16 %v275
    %v286 = vunpack.c.l.b16 %v276
    %v287 = vunpack.c.l.b16 %v277
    %v288 = vunpack.c.l.b16 %v278
    %v289 = vpack.c.b16 %v285, %v284
    %v290 = vpack.c.b16 %v287, %v286
    %v291 = vpack.c.b16 %v288, %v288
    %292 = vrot.lane.b32.xlu0 %v289, 15
    %v293 = vpop.permute.xlu0 %292
    %294 = vrot.lane.b32.xlu0 %v290, 15
    %v295 = vpop.permute.xlu0 %294
    %296 = vrot.lane.b32.xlu0 %v291, 15
    %v297 = vpop.permute.xlu0 %296
    %v298 = vrot.slane %v293, 4
    %v299 = vrot.slane %v295, 4
    %v300 = vrot.slane %v297, 4
    %v301 = vsel %vm136, %v298, %v299
    %vm302 = vcmask 121856
    %v303 = vsel %vm302, %v293, %v301
    %v304 = vsel %vm136, %v299, %v300
    %v305 = vsel %vm302, %v295, %v304
    %308 = vst [vmem:[#allocation3 + $0x20] sm:$0xff] %v303
    %309 = vst [vmem:[#allocation3 + $0x28] sm:$0xff] %v305
    %v310 = vld [vmem:[#allocation2] sm:$0xff]
    %v311 = vld [vmem:[#allocation2 + $0x8] sm:$0xff]
    %v312 = vld [vmem:[#allocation2 + $0x10] sm:$0xff]
    %v313 = vld [vmem:[#allocation2 + $0x18] sm:$0xff]
    %v314 = vld [vmem:[#allocation2 + $0x20] sm:$0xff]
    %s315 = scalar_lea.vmem [#allocation4], 3
    %v316 = vld [vmem:[%s315] ss:$8 sm:$0xf]
    %v318 = vlaneseq
    %v319 = vshrl.u32 %v318, 7
    %v320 = vsub.s32 0, %v319
    %v321 = vrot.slane %v316, %v320
    %v322 = vlaneseq
    %v323 = vshrl.u32 %v322, 7
    %v324 = vsub.s32 1, %v323
    %v325 = vrot.slane %v316, %v324
    %v326 = vlaneseq
    %v327 = vshrl.u32 %v326, 7
    %v328 = vsub.s32 2, %v327
    %v329 = vrot.slane %v316, %v328
    %v330 = vlaneseq
    %v331 = vshrl.u32 %v330, 7
    %v332 = vsub.s32 3, %v331
    %v333 = vrot.slane %v316, %v332
    %334 = vrot.lane.b32.xlu0 %v321, 127
    %v335 = vpop.permute.xlu0 %334
    %336 = vrot.lane.b32.xlu0 %v325, 127
    %v337 = vpop.permute.xlu0 %336
    %338 = vrot.lane.b32.xlu0 %v329, 127
    %v339 = vpop.permute.xlu0 %338
    %340 = vrot.lane.b32.xlu0 %v333, 127
    %v341 = vpop.permute.xlu0 %340
    %vm342 = vcmask 1039360
    %v343 = vsel %vm342, %v335, %v337
    %v344 = vsel %vm342, %v337, %v339
    %v345 = vsel %vm342, %v339, %v341
    %v351 = vmul.f32 %v310, %v335
    %v352 = vmul.f32 %v311, %v343
    %v353 = vmul.f32 %v312, %v344
    %v354 = vmul.f32 %v313, %v345
    %v355 = vmul.f32 %v314, %v341
    %v356 = vpack.c.bf16 %v351, %v351
    %v357 = vpack.c.bf16 %v352, %v352
    %v358 = vpack.c.bf16 %v353, %v353
    %v359 = vpack.c.bf16 %v354, %v354
    %v360 = vpack.c.bf16 %v355, %v355
    %v366 = vunpack.c.l.b16 %v356
    %v367 = vunpack.c.l.b16 %v357
    %v368 = vunpack.c.l.b16 %v358
    %v369 = vunpack.c.l.b16 %v359
    %v370 = vunpack.c.l.b16 %v360
    %v371 = vpack.c.b16 %v367, %v366
    %v372 = vpack.c.b16 %v369, %v368
    %v373 = vpack.c.b16 %v370, %v370
    %374 = vrot.lane.b32.xlu0 %v371, 1
    %v375 = vpop.permute.xlu0 %374
    %376 = vrot.lane.b32.xlu0 %v372, 1
    %v377 = vpop.permute.xlu0 %376
    %378 = vrot.lane.b32.xlu0 %v373, 1
    %v379 = vpop.permute.xlu0 %378
    %v380 = vrot.slane %v375, 4
    %v381 = vrot.slane %v377, 4
    %v382 = vrot.slane %v379, 4
    %v383 = vsel %vm136, %v380, %v381
    %vm384 = vcmask 7168
    %v385 = vsel %vm384, %v375, %v383
    %v386 = vsel %vm136, %v381, %v382
    %v387 = vsel %vm384, %v377, %v386
    %390 = vst [vmem:[#allocation3 + $0x30] sm:$0xff] %v385
    %391 = vst [vmem:[#allocation3 + $0x38] sm:$0xff] %v387
    %v392 = vld [vmem:[#allocation2 + $0x8] sm:$0xff]
    %v393 = vld [vmem:[#allocation2 + $0x10] sm:$0xff]
    %v394 = vld [vmem:[#allocation2 + $0x18] sm:$0xff]
    %v395 = vld [vmem:[#allocation2 + $0x20] sm:$0xff]
    %s396 = scalar_lea.vmem [#allocation4], 4
    %v397 = vld [vmem:[%s396] ss:$8 sm:$0xf]
    %v399 = vlaneseq
    %v400 = vshrl.u32 %v399, 7
    %v401 = vsub.s32 0, %v400
    %v402 = vrot.slane %v397, %v401
    %v403 = vlaneseq
    %v404 = vshrl.u32 %v403, 7
    %v405 = vsub.s32 1, %v404
    %v406 = vrot.slane %v397, %v405
    %v407 = vlaneseq
    %v408 = vshrl.u32 %v407, 7
    %v409 = vsub.s32 2, %v408
    %v410 = vrot.slane %v397, %v409
    %v411 = vlaneseq
    %v412 = vshrl.u32 %v411, 7
    %v413 = vsub.s32 3, %v412
    %v414 = vrot.slane %v397, %v413
    %v419 = vmul.f32 %v392, %v402
    %v420 = vmul.f32 %v393, %v406
    %v421 = vmul.f32 %v394, %v410
    %v422 = vmul.f32 %v395, %v414
    %v423 = vpack.c.bf16 %v419, %v419
    %v424 = vpack.c.bf16 %v420, %v420
    %v425 = vpack.c.bf16 %v421, %v421
    %v426 = vpack.c.bf16 %v422, %v422
    %v431 = vunpack.c.l.b16 %v423
    %v432 = vunpack.c.l.b16 %v424
    %v433 = vunpack.c.l.b16 %v425
    %v434 = vunpack.c.l.b16 %v426
    %v435 = vpack.c.b16 %v432, %v431
    %v436 = vpack.c.b16 %v434, %v433
    %439 = vst [vmem:[#allocation3 + $0x40] sm:$0xff] %v435
    %440 = vst [vmem:[#allocation3 + $0x48] sm:$0xff] %v436
    %v441 = vld [vmem:[#allocation2 + $0x8] sm:$0xff]
    %v442 = vld [vmem:[#allocation2 + $0x10] sm:$0xff]
    %v443 = vld [vmem:[#allocation2 + $0x18] sm:$0xff]
    %v444 = vld [vmem:[#allocation2 + $0x20] sm:$0xff]
    %v445 = vld [vmem:[#allocation2 + $0x28] sm:$0xff]
    %s446 = scalar_lea.vmem [#allocation4], 5
    %v447 = vld [vmem:[%s446] ss:$8 sm:$0xf]
    %v449 = vlaneseq
    %v450 = vshrl.u32 %v449, 7
    %v451 = vsub.s32 0, %v450
    %v452 = vrot.slane %v447, %v451
    %v453 = vlaneseq
    %v454 = vshrl.u32 %v453, 7
    %v455 = vsub.s32 1, %v454
    %v456 = vrot.slane %v447, %v455
    %v457 = vlaneseq
    %v458 = vshrl.u32 %v457, 7
    %v459 = vsub.s32 2, %v458
    %v460 = vrot.slane %v447, %v459
    %v461 = vlaneseq
    %v462 = vshrl.u32 %v461, 7
    %v463 = vsub.s32 3, %v462
    %v464 = vrot.slane %v447, %v463
    %465 = vrot.lane.b32.xlu0 %v452, 1
    %v466 = vpop.permute.xlu0 %465
    %467 = vrot.lane.b32.xlu0 %v456, 1
    %v468 = vpop.permute.xlu0 %467
    %469 = vrot.lane.b32.xlu0 %v460, 1
    %v470 = vpop.permute.xlu0 %469
    %471 = vrot.lane.b32.xlu0 %v464, 1
    %v472 = vpop.permute.xlu0 %471
    %vm473 = vcmask 7168
    %v474 = vsel %vm473, %v466, %v468
    %v475 = vsel %vm473, %v468, %v470
    %v476 = vsel %vm473, %v470, %v472
    %v482 = vmul.f32 %v441, %v466
    %v483 = vmul.f32 %v442, %v474
    %v484 = vmul.f32 %v443, %v475
    %v485 = vmul.f32 %v444, %v476
    %v486 = vmul.f32 %v445, %v472
    %v487 = vpack.c.bf16 %v482, %v482
    %v488 = vpack.c.bf16 %v483, %v483
    %v489 = vpack.c.bf16 %v484, %v484
    %v490 = vpack.c.bf16 %v485, %v485
    %v491 = vpack.c.bf16 %v486, %v486
    %v497 = vunpack.c.l.b16 %v487
    %v498 = vunpack.c.l.b16 %v488
    %v499 = vunpack.c.l.b16 %v489
    %v500 = vunpack.c.l.b16 %v490
    %v501 = vunpack.c.l.b16 %v491
    %v502 = vpack.c.b16 %v498, %v497
    %v503 = vpack.c.b16 %v500, %v499
    %v504 = vpack.c.b16 %v501, %v501
    %505 = vrot.lane.b32.xlu0 %v502, 127
    %v506 = vpop.permute.xlu0 %505
    %507 = vrot.lane.b32.xlu0 %v503, 127
    %v508 = vpop.permute.xlu0 %507
    %509 = vrot.lane.b32.xlu0 %v504, 127
    %v510 = vpop.permute.xlu0 %509
    %v511 = vrot.slane %v506, 4
    %v512 = vrot.slane %v508, 4
    %v513 = vrot.slane %v510, 4
    %v514 = vsel %vm136, %v511, %v512
    %vm515 = vcmask 1039360
    %v516 = vsel %vm515, %v506, %v514
    %v517 = vsel %vm136, %v512, %v513
    %v518 = vsel %vm515, %v508, %v517
    %521 = vst [vmem:[#allocation3 + $0x50] sm:$0xff] %v516
    %522 = vst [vmem:[#allocation3 + $0x58] sm:$0xff] %v518
    %v523 = vld [vmem:[#allocation2 + $0x8] sm:$0xff]
    %v524 = vld [vmem:[#allocation2 + $0x10] sm:$0xff]
    %v525 = vld [vmem:[#allocation2 + $0x18] sm:$0xff]
    %v526 = vld [vmem:[#allocation2 + $0x20] sm:$0xff]
    %v527 = vld [vmem:[#allocation2 + $0x28] sm:$0xff]
    %s528 = scalar_lea.vmem [#allocation4], 6
    %v529 = vld [vmem:[%s528] ss:$8 sm:$0xf]
    %v531 = vlaneseq
    %v532 = vshrl.u32 %v531, 7
    %v533 = vsub.s32 0, %v532
    %v534 = vrot.slane %v529, %v533
    %v535 = vlaneseq
    %v536 = vshrl.u32 %v535, 7
    %v537 = vsub.s32 1, %v536
    %v538 = vrot.slane %v529, %v537
    %v539 = vlaneseq
    %v540 = vshrl.u32 %v539, 7
    %v541 = vsub.s32 2, %v540
    %v542 = vrot.slane %v529, %v541
    %v543 = vlaneseq
    %v544 = vshrl.u32 %v543, 7
    %v545 = vsub.s32 3, %v544
    %v546 = vrot.slane %v529, %v545
    %547 = vrot.lane.b32.xlu0 %v534, 15
    %v548 = vpop.permute.xlu0 %547
    %549 = vrot.lane.b32.xlu0 %v538, 15
    %v550 = vpop.permute.xlu0 %549
    %551 = vrot.lane.b32.xlu0 %v542, 15
    %v552 = vpop.permute.xlu0 %551
    %553 = vrot.lane.b32.xlu0 %v546, 15
    %v554 = vpop.permute.xlu0 %553
    %vm555 = vcmask 121856
    %v556 = vsel %vm555, %v548, %v550
    %v557 = vsel %vm555, %v550, %v552
    %v558 = vsel %vm555, %v552, %v554
    %v564 = vmul.f32 %v523, %v548
    %v565 = vmul.f32 %v524, %v556
    %v566 = vmul.f32 %v525, %v557
    %v567 = vmul.f32 %v526, %v558
    %v568 = vmul.f32 %v527, %v554
    %v569 = vpack.c.bf16 %v564, %v564
    %v570 = vpack.c.bf16 %v565, %v565
    %v571 = vpack.c.bf16 %v566, %v566
    %v572 = vpack.c.bf16 %v567, %v567
    %v573 = vpack.c.bf16 %v568, %v568
    %v579 = vunpack.c.l.b16 %v569
    %v580 = vunpack.c.l.b16 %v570
    %v581 = vunpack.c.l.b16 %v571
    %v582 = vunpack.c.l.b16 %v572
    %v583 = vunpack.c.l.b16 %v573
    %v584 = vpack.c.b16 %v580, %v579
    %v585 = vpack.c.b16 %v582, %v581
    %v586 = vpack.c.b16 %v583, %v583
    %587 = vrot.lane.b32.xlu0 %v584, 113
    %v588 = vpop.permute.xlu0 %587
    %589 = vrot.lane.b32.xlu0 %v585, 113
    %v590 = vpop.permute.xlu0 %589
    %591 = vrot.lane.b32.xlu0 %v586, 113
    %v592 = vpop.permute.xlu0 %591
    %v593 = vrot.slane %v588, 4
    %v594 = vrot.slane %v590, 4
    %v595 = vrot.slane %v592, 4
    %v596 = vsel %vm136, %v593, %v594
    %vm597 = vcmask 924672
    %v598 = vsel %vm597, %v588, %v596
    %v599 = vsel %vm136, %v594, %v595
    %v600 = vsel %vm597, %v590, %v599
    %603 = vst [vmem:[#allocation3 + $0x60] sm:$0xff] %v598
    %604 = vst [vmem:[#allocation3 + $0x68] sm:$0xff] %v600
    %v605 = vld [vmem:[#allocation2 + $0x8] sm:$0xff]
    %v606 = vld [vmem:[#allocation2 + $0x10] sm:$0xff]
    %v607 = vld [vmem:[#allocation2 + $0x18] sm:$0xff]
    %v608 = vld [vmem:[#allocation2 + $0x20] sm:$0xff]
    %v609 = vld [vmem:[#allocation2 + $0x28] sm:$0xff]
    %s610 = scalar_lea.vmem [#allocation4], 7
    %v611 = vld [vmem:[%s610] ss:$8 sm:$0xf]
    %v613 = vlaneseq
    %v614 = vshrl.u32 %v613, 7
    %v615 = vsub.s32 0, %v614
    %v616 = vrot.slane %v611, %v615
    %v617 = vlaneseq
    %v618 = vshrl.u32 %v617, 7
    %v619 = vsub.s32 1, %v618
    %v620 = vrot.slane %v611, %v619
    %v621 = vlaneseq
    %v622 = vshrl.u32 %v621, 7
    %v623 = vsub.s32 2, %v622
    %v624 = vrot.slane %v611, %v623
    %v625 = vlaneseq
    %v626 = vshrl.u32 %v625, 7
    %v627 = vsub.s32 3, %v626
    %v628 = vrot.slane %v611, %v627
    %629 = vrot.lane.b32.xlu0 %v616, 16
    %v630 = vpop.permute.xlu0 %629
    %631 = vrot.lane.b32.xlu0 %v620, 16
    %v632 = vpop.permute.xlu0 %631
    %633 = vrot.lane.b32.xlu0 %v624, 16
    %v634 = vpop.permute.xlu0 %633
    %635 = vrot.lane.b32.xlu0 %v628, 16
    %v636 = vpop.permute.xlu0 %635
    %vm637 = vcmask 130048
    %v638 = vsel %vm637, %v630, %v632
    %v639 = vsel %vm637, %v632, %v634
    %v640 = vsel %vm637, %v634, %v636
    %v646 = vmul.f32 %v605, %v630
    %v647 = vmul.f32 %v606, %v638
    %v648 = vmul.f32 %v607, %v639
    %v649 = vmul.f32 %v608, %v640
    %v650 = vmul.f32 %v609, %v636
    %v651 = vpack.c.bf16 %v646, %v646
    %v652 = vpack.c.bf16 %v647, %v647
    %v653 = vpack.c.bf16 %v648, %v648
    %v654 = vpack.c.bf16 %v649, %v649
    %v655 = vpack.c.bf16 %v650, %v650
    %v661 = vunpack.c.l.b16 %v651
    %v662 = vunpack.c.l.b16 %v652
    %v663 = vunpack.c.l.b16 %v653
    %v664 = vunpack.c.l.b16 %v654
    %v665 = vunpack.c.l.b16 %v655
    %v666 = vpack.c.b16 %v662, %v661
    %v667 = vpack.c.b16 %v664, %v663
    %v668 = vpack.c.b16 %v665, %v665
    %669 = vrot.lane.b32.xlu0 %v666, 112
    %v670 = vpop.permute.xlu0 %669
    %671 = vrot.lane.b32.xlu0 %v667, 112
    %v672 = vpop.permute.xlu0 %671
    %673 = vrot.lane.b32.xlu0 %v668, 112
    %v674 = vpop.permute.xlu0 %673
    %v675 = vrot.slane %v670, 4
    %v676 = vrot.slane %v672, 4
    %v677 = vrot.slane %v674, 4
    %v678 = vsel %vm136, %v675, %v676
    %vm679 = vcmask 916480
    %v680 = vsel %vm679, %v670, %v678
    %v681 = vsel %vm136, %v676, %v677
    %v682 = vsel %vm679, %v672, %v681
    %685 = vst [vmem:[#allocation3 + $0x70] sm:$0xff] %v680
    %686 = vst [vmem:[#allocation3 + $0x78] sm:$0xff] %v682
    %v687 = vld [vmem:[#allocation2 + $0x8] sm:$0xff]
    %v688 = vld [vmem:[#allocation2 + $0x10] sm:$0xff]
    %v689 = vld [vmem:[#allocation2 + $0x18] sm:$0xff]
    %v690 = vld [vmem:[#allocation2 + $0x20] sm:$0xff]
    %v691 = vld [vmem:[#allocation2 + $0x28] sm:$0xff]
    %s692 = scalar_lea.vmem [#allocation4], 32
    %v693 = vld [vmem:[%s692] ss:$8 sm:$0xf]
    %v695 = vlaneseq
    %v696 = vshrl.u32 %v695, 7
    %v697 = vsub.s32 0, %v696
    %v698 = vrot.slane %v693, %v697
    %v699 = vlaneseq
    %v700 = vshrl.u32 %v699, 7
    %v701 = vsub.s32 1, %v700
    %v702 = vrot.slane %v693, %v701
    %v703 = vlaneseq
    %v704 = vshrl.u32 %v703, 7
    %v705 = vsub.s32 2, %v704
    %v706 = vrot.slane %v693, %v705
    %v707 = vlaneseq
    %v708 = vshrl.u32 %v707, 7
    %v709 = vsub.s32 3, %v708
    %v710 = vrot.slane %v693, %v709
    %711 = vrot.lane.b32.xlu0 %v698, 17
    %v712 = vpop.permute.xlu0 %711
    %713 = vrot.lane.b32.xlu0 %v702, 17
    %v714 = vpop.permute.xlu0 %713
    %715 = vrot.lane.b32.xlu0 %v706, 17
    %v716 = vpop.permute.xlu0 %715
    %717 = vrot.lane.b32.xlu0 %v710, 17
    %v718 = vpop.permute.xlu0 %717
    %vm719 = vcmask 138240
    %v720 = vsel %vm719, %v712, %v714
    %v721 = vsel %vm719, %v714, %v716
    %v722 = vsel %vm719, %v716, %v718
    %v728 = vmul.f32 %v687, %v712
    %v729 = vmul.f32 %v688, %v720
    %v730 = vmul.f32 %v689, %v721
    %v731 = vmul.f32 %v690, %v722
    %v732 = vmul.f32 %v691, %v718
    %v733 = vpack.c.bf16 %v728, %v728
    %v734 = vpack.c.bf16 %v729, %v729
    %v735 = vpack.c.bf16 %v730, %v730
    %v736 = vpack.c.bf16 %v731, %v731
    %v737 = vpack.c.bf16 %v732, %v732
    %v743 = vunpack.c.l.b16 %v733
    %v744 = vunpack.c.l.b16 %v734
    %v745 = vunpack.c.l.b16 %v735
    %v746 = vunpack.c.l.b16 %v736
    %v747 = vunpack.c.l.b16 %v737
    %v748 = vpack.c.b16 %v744, %v743
    %v749 = vpack.c.b16 %v746, %v745
    %v750 = vpack.c.b16 %v747, %v747
    %751 = vrot.lane.b32.xlu0 %v748, 111
    %v752 = vpop.permute.xlu0 %751
    %753 = vrot.lane.b32.xlu0 %v749, 111
    %v754 = vpop.permute.xlu0 %753
    %755 = vrot.lane.b32.xlu0 %v750, 111
    %v756 = vpop.permute.xlu0 %755
    %v757 = vrot.slane %v752, 4
    %v758 = vrot.slane %v754, 4
    %v759 = vrot.slane %v756, 4
    %v760 = vsel %vm136, %v757, %v758
    %vm761 = vcmask 908288
    %v762 = vsel %vm761, %v752, %v760
    %v763 = vsel %vm136, %v758, %v759
    %v764 = vsel %vm761, %v754, %v763
    %767 = vst [vmem:[#allocation3 + $0x80] sm:$0xff] %v762
    %768 = vst [vmem:[#allocation3 + $0x88] sm:$0xff] %v764
    %v769 = vld [vmem:[%s2] sm:$0xf]
    %v770 = vld [vmem:[#allocation3] sm:$0xff]
    %v771 = vld [vmem:[#allocation3 + $0x8] sm:$0xff]
    %v772 = vld [vmem:[#allocation3 + $0x10] sm:$0xff]
    %v773 = vld [vmem:[#allocation3 + $0x18] sm:$0xff]
    %v774 = vld [vmem:[#allocation3 + $0x20] sm:$0xff]
    %v775 = vld [vmem:[#allocation3 + $0x28] sm:$0xff]
    %v776 = vld [vmem:[#allocation3 + $0x30] sm:$0xff]
    %v777 = vld [vmem:[#allocation3 + $0x38] sm:$0xff]
    %v778 = vld [vmem:[#allocation3 + $0x40] sm:$0xff]
    %v779 = vld [vmem:[#allocation3 + $0x48] sm:$0xff]
    %v780 = vld [vmem:[#allocation3 + $0x50] sm:$0xff]
    %v781 = vld [vmem:[#allocation3 + $0x58] sm:$0xff]
    %v782 = vld [vmem:[#allocation3 + $0x60] sm:$0xff]
    %v783 = vld [vmem:[#allocation3 + $0x68] sm:$0xff]
    %v784 = vld [vmem:[#allocation3 + $0x70] sm:$0xff]
    %v785 = vld [vmem:[#allocation3 + $0x78] sm:$0xff]
    %v786 = vld [vmem:[#allocation3 + $0x80] sm:$0xff]
    %v787 = vld [vmem:[#allocation3 + $0x88] sm:$0xff]
    %v806 = vunpack.c.l.b16 %v770
    %v807 = vunpack.c.h.b16 %v770
    %v808 = vunpack.c.l.b16 %v771
    %v809 = vunpack.c.h.b16 %v771
    %v810 = vunpack.c.l.b16 %v772
    %v811 = vunpack.c.h.b16 %v772
    %v812 = vunpack.c.l.b16 %v773
    %v813 = vunpack.c.h.b16 %v773
    %v814 = vunpack.c.l.b16 %v774
    %v815 = vunpack.c.h.b16 %v774
    %v816 = vunpack.c.l.b16 %v775
    %v817 = vunpack.c.h.b16 %v775
    %v818 = vunpack.c.l.b16 %v776
    %v819 = vunpack.c.h.b16 %v776
    %v820 = vunpack.c.l.b16 %v777
    %v821 = vunpack.c.h.b16 %v777
    %v822 = vunpack.c.l.b16 %v778
    %v823 = vunpack.c.h.b16 %v778
    %v824 = vunpack.c.l.b16 %v779
    %v825 = vunpack.c.h.b16 %v779
    %v826 = vunpack.c.l.b16 %v780
    %v827 = vunpack.c.h.b16 %v780
    %v828 = vunpack.c.l.b16 %v781
    %v829 = vunpack.c.h.b16 %v781
    %v830 = vunpack.c.l.b16 %v782
    %v831 = vunpack.c.h.b16 %v782
    %v832 = vunpack.c.l.b16 %v783
    %v833 = vunpack.c.h.b16 %v783
    %v834 = vunpack.c.l.b16 %v784
    %v835 = vunpack.c.h.b16 %v784
    %v836 = vunpack.c.l.b16 %v785
    %v837 = vunpack.c.h.b16 %v785
    %v838 = vunpack.c.l.b16 %v786
    %v839 = vunpack.c.h.b16 %v786
    %v840 = vunpack.c.l.b16 %v787
    %v841 = vunpack.c.h.b16 %v787
    %v842 = vpack.c.b16 %v810, %v806
    %v843 = vpack.c.b16 %v811, %v807
    %v844 = vpack.c.b16 %v812, %v808
    %v845 = vpack.c.b16 %v813, %v809
    %v846 = vpack.c.b16 %v818, %v814
    %v847 = vpack.c.b16 %v819, %v815
    %v848 = vpack.c.b16 %v820, %v816
    %v849 = vpack.c.b16 %v821, %v817
    %v850 = vpack.c.b16 %v826, %v822
    %v851 = vpack.c.b16 %v827, %v823
    %v852 = vpack.c.b16 %v828, %v824
    %v853 = vpack.c.b16 %v829, %v825
    %v854 = vpack.c.b16 %v834, %v830
    %v855 = vpack.c.b16 %v835, %v831
    %v856 = vpack.c.b16 %v836, %v832
    %v857 = vpack.c.b16 %v837, %v833
    %v858 = vpack.c.b16 %v838, %v838
    %v859 = vpack.c.b16 %v839, %v839
    %v860 = vpack.c.b16 %v840, %v840
    %v861 = vpack.c.b16 %v841, %v841
    %vm878 = vcmask 588800
    %v880 = vsel %vm878, %v769, 0
    %vm882 = vcmask 1043456
    %v884 = vsel %vm882, %v858, 0
    %v887 = vsel %vm882, %v859, 0
    %v890 = vsel %vm882, %v860, 0
    %v893 = vsel %vm882, %v861, 0
    %895 = vmatprep.subr.bf16.mxu0 0
    %896 = vmatpush1.bf16.msra.mxu0 0
    %897 = vmatprep.subr.bf16.mxu0 0
    %898 = vmatpush1.bf16.msra.mxu0 0
    %899 = vmatprep.subr.bf16.mxu0 0
    %900 = vmatpush1.bf16.msra.mxu0 0
    %901 = vmatprep.subr.bf16.mxu0 %v887
    %902 = vmatpush1.bf16.msra.mxu0 %v884
    %903 = vmatprep.subr.bf16.mxu0 %v855
    %904 = vmatpush1.bf16.msra.mxu0 %v854
    %905 = vmatprep.subr.bf16.mxu0 %v851
    %906 = vmatpush1.bf16.msra.mxu0 %v850
    %907 = vmatprep.subr.bf16.mxu0 %v847
    %908 = vmatpush1.bf16.msra.mxu0 %v846
    %909 = vmatprep.subr.bf16.mxu0 %v843
    %910 = vmatpush1.bf16.msra.mxu0 %v842
    %911 = vmatprep.subr.bf16.mxu0 0
    %912 = vmatpush2.bf16.msra.mxu0 0
    %913 = vmatprep.subr.bf16.mxu0 0
    %914 = vmatpush2.bf16.msra.mxu0 0
    %915 = vmatprep.subr.bf16.mxu0 0
    %916 = vmatpush2.bf16.msra.mxu0 0
    %917 = vmatprep.subr.bf16.mxu0 0
    %918 = vmatpush2.bf16.msra.mxu0 0
    %919 = vmatprep.subr.bf16.mxu0 0
    %920 = vmatpush2.bf16.msra.mxu0 0
    %921 = vmatprep.subr.bf16.mxu0 0
    %922 = vmatpush2.bf16.msra.mxu0 0
    %923 = vmatprep.subr.bf16.mxu0 0
    %924 = vmatpush2.bf16.msra.mxu0 0
    %925 = vmatprep.subr.bf16.mxu0 0
    %926 = vmatpush2.bf16.msra.mxu0 0
    %927 = vmatprep.mubr.bf16.mxu0 0
    %928 = vmatmul.mubr.bf16.gmra.mxu0 %v880
    %v929 = vpop.f32.mrf.mxu0
    %v930 = vadd.f32 0.0, %v929
    %v931 = vpop.f32.mrf.mxu0
    %v932 = vadd.f32 0.0, %v931
    %v933 = vpop.f32.mrf.mxu0
    %v934 = vpop.f32.mrf.mxu0
    %935 = vdwg.mxu0
    %936 = vmatprep.subr.bf16.mxu0 0
    %937 = vmatpush1.bf16.msra.mxu0 0
    %938 = vmatprep.subr.bf16.mxu0 0
    %939 = vmatpush1.bf16.msra.mxu0 0
    %940 = vmatprep.subr.bf16.mxu0 0
    %941 = vmatpush1.bf16.msra.mxu0 0
    %942 = vmatprep.subr.bf16.mxu0 %v893
    %943 = vmatpush1.bf16.msra.mxu0 %v890
    %944 = vmatprep.subr.bf16.mxu0 %v857
    %945 = vmatpush1.bf16.msra.mxu0 %v856
    %946 = vmatprep.subr.bf16.mxu0 %v853
    %947 = vmatpush1.bf16.msra.mxu0 %v852
    %948 = vmatprep.subr.bf16.mxu0 %v849
    %949 = vmatpush1.bf16.msra.mxu0 %v848
    %950 = vmatprep.subr.bf16.mxu0 %v845
    %951 = vmatpush1.bf16.msra.mxu0 %v844
    %952 = vmatprep.subr.bf16.mxu0 0
    %953 = vmatpush2.bf16.msra.mxu0 0
    %954 = vmatprep.subr.bf16.mxu0 0
    %955 = vmatpush2.bf16.msra.mxu0 0
    %956 = vmatprep.subr.bf16.mxu0 0
    %957 = vmatpush2.bf16.msra.mxu0 0
    %958 = vmatprep.subr.bf16.mxu0 0
    %959 = vmatpush2.bf16.msra.mxu0 0
    %960 = vmatprep.subr.bf16.mxu0 0
    %961 = vmatpush2.bf16.msra.mxu0 0
    %962 = vmatprep.subr.bf16.mxu0 0
    %963 = vmatpush2.bf16.msra.mxu0 0
    %964 = vmatprep.subr.bf16.mxu0 0
    %965 = vmatpush2.bf16.msra.mxu0 0
    %966 = vmatprep.subr.bf16.mxu0 0
    %967 = vmatpush2.bf16.msra.mxu0 0
    %968 = vmatprep.mubr.bf16.mxu0 0
    %969 = vmatmul.mubr.bf16.gmra.mxu0 %v880
    %v970 = vpop.f32.mrf.mxu0
    %v971 = vadd.f32 0.0, %v970
    %v972 = vpop.f32.mrf.mxu0
    %v973 = vadd.f32 0.0, %v972
    %v974 = vpop.f32.mrf.mxu0
    %v975 = vpop.f32.mrf.mxu0
    %976 = vdwg.mxu0
    %v977 = vadd.f32 %v930, %v932
    %v978 = vadd.f32 %v977, %v971
    %v979 = vadd.f32 %v978, %v973
    %980 = vadd.xlane.f32.xlu0 %v979
    %v981 = vpop.xlane.xlu0 %980
    %v982 = vmul.f32 %v981, 0.001953125
    %v983 = vsub.f32 %v930, %v982
    %v984 = vsub.f32 %v932, %v982
    %v985 = vsub.f32 %v971, %v982
    %v986 = vsub.f32 %v973, %v982
    %v987 = vmul.f32 %v983, %v983
    %v988 = vmul.f32 %v984, %v984
    %v989 = vmul.f32 %v985, %v985
    %v990 = vmul.f32 %v986, %v986
    %v991 = vadd.f32 %v987, %v988
    %v992 = vadd.f32 %v991, %v989
    %v993 = vadd.f32 %v992, %v990
    %994 = vadd.xlane.f32.xlu0 %v993
    %v995 = vpop.xlane.xlu0 %994
    %v996 = vmul.f32 %v995, 0.001953125
    %v997 = vadd.f32 %v996, 1e-05
    %v998 = vrsqrt.pop %v997
    %v999 = vmul.f32 %v983, %v998
    %v1000 = vmul.f32 %v984, %v998
    %v1001 = vmul.f32 %v985, %v998
    %v1002 = vmul.f32 %v986, %v998
    %v1003 = vld [vmem:[%s3] sm:$0xff]
    %1005 = vset.pattern.permute.xlu0 0
    %1006 = vperm.xlu0 %1005, %v1003
    %v1007 = vpop.permute.xlu0 %1006
    %v1009 = vmul.f32 %v999, %v1007
    %v1010 = vmul.f32 %v1000, %v1007
    %v1011 = vmul.f32 %v1001, %v1007
    %v1012 = vmul.f32 %v1002, %v1007
    %v1013 = vld [vmem:[%s4] sm:$0xff]
    %1015 = vset.pattern.permute.xlu0 0
    %1016 = vperm.xlu0 %1015, %v1013
    %v1017 = vpop.permute.xlu0 %1016
    %v1019 = vadd.f32 %v1009, %v1017
    %v1020 = vadd.f32 %v1010, %v1017
    %v1021 = vadd.f32 %v1011, %v1017
    %v1022 = vadd.f32 %v1012, %v1017
    %v1023 = vmax.f32 %v1019, 0.0
    %v1024 = vmax.f32 %v1020, 0.0
    %v1025 = vmax.f32 %v1021, 0.0
    %v1026 = vmax.f32 %v1022, 0.0
    %1027 = vst [vmem:[#allocation2 + $0x8] sm:$0xff] %v1023
    %1028 = vst [vmem:[#allocation2 + $0x10] sm:$0xff] %v1024
    %1029 = vst [vmem:[#allocation2 + $0x18] sm:$0xff] %v1025
    %1030 = vst [vmem:[#allocation2 + $0x20] sm:$0xff] %v1026
    %v1031 = vld [vmem:[#allocation2] sm:$0xff]
    %v1032 = vld [vmem:[#allocation2 + $0x8] sm:$0xff]
    %v1033 = vld [vmem:[#allocation2 + $0x10] sm:$0xff]
    %v1034 = vld [vmem:[#allocation2 + $0x18] sm:$0xff]
    %v1035 = vld [vmem:[#allocation2 + $0x20] sm:$0xff]
    %v1036 = vld [vmem:[#allocation4] ss:$8 sm:$0xf]
    %v1038 = vlaneseq
    %v1039 = vshrl.u32 %v1038, 7
    %v1040 = vsub.s32 0, %v1039
    %v1041 = vrot.slane %v1036, %v1040
    %v1042 = vlaneseq
    %v1043 = vshrl.u32 %v1042, 7
    %v1044 = vsub.s32 1, %v1043
    %v1045 = vrot.slane %v1036, %v1044
    %v1046 = vlaneseq
    %v1047 = vshrl.u32 %v1046, 7
    %v1048 = vsub.s32 2, %v1047
    %v1049 = vrot.slane %v1036, %v1048
    %v1050 = vlaneseq
    %v1051 = vshrl.u32 %v1050, 7
    %v1052 = vsub.s32 3, %v1051
    %v1053 = vrot.slane %v1036, %v1052
    %1054 = vrot.lane.b32.xlu0 %v1041, 111
    %v1055 = vpop.permute.xlu0 %1054
    %1056 = vrot.lane.b32.xlu0 %v1045, 111
    %v1057 = vpop.permute.xlu0 %1056
    %1058 = vrot.lane.b32.xlu0 %v1049, 111
    %v1059 = vpop.permute.xlu0 %1058
    %1060 = vrot.lane.b32.xlu0 %v1053, 111
    %v1061 = vpop.permute.xlu0 %1060
    %v1062 = vsel %vm95, %v1055, %v1057
    %v1063 = vsel %vm95, %v1057, %v1059
    %v1064 = vsel %vm95, %v1059, %v1061
    %v1070 = vmul.f32 %v1031, %v1055
    %v1071 = vmul.f32 %v1032, %v1062
    %v1072 = vmul.f32 %v1033, %v1063
    %v1073 = vmul.f32 %v1034, %v1064
    %v1074 = vmul.f32 %v1035, %v1061
    %v1075 = vpack.c.bf16 %v1070, %v1070
    %v1076 = vpack.c.bf16 %v1071, %v1071
    %v1077 = vpack.c.bf16 %v1072, %v1072
    %v1078 = vpack.c.bf16 %v1073, %v1073
    %v1079 = vpack.c.bf16 %v1074, %v1074
    %v1085 = vunpack.c.l.b16 %v1075
    %v1086 = vunpack.c.l.b16 %v1076
    %v1087 = vunpack.c.l.b16 %v1077
    %v1088 = vunpack.c.l.b16 %v1078
    %v1089 = vunpack.c.l.b16 %v1079
    %v1090 = vpack.c.b16 %v1086, %v1085
    %v1091 = vpack.c.b16 %v1088, %v1087
    %v1092 = vpack.c.b16 %v1089, %v1089
    %1093 = vrot.lane.b32.xlu0 %v1090, 17
    %v1094 = vpop.permute.xlu0 %1093
    %1095 = vrot.lane.b32.xlu0 %v1091, 17
    %v1096 = vpop.permute.xlu0 %1095
    %1097 = vrot.lane.b32.xlu0 %v1092, 17
    %v1098 = vpop.permute.xlu0 %1097
    %v1099 = vrot.slane %v1094, 4
    %v1100 = vrot.slane %v1096, 4
    %v1101 = vrot.slane %v1098, 4
    %v1102 = vsel %vm136, %v1099, %v1100
    %v1103 = vsel %vm138, %v1094, %v1102
    %v1104 = vsel %vm136, %v1100, %v1101
    %v1105 = vsel %vm138, %v1096, %v1104
    %1108 = vst [vmem:[#allocation3] sm:$0xff] %v1103
    %1109 = vst [vmem:[#allocation3 + $0x8] sm:$0xff] %v1105
    %v1110 = vld [vmem:[#allocation2] sm:$0xff]
    %v1111 = vld [vmem:[#allocation2 + $0x8] sm:$0xff]
    %v1112 = vld [vmem:[#allocation2 + $0x10] sm:$0xff]
    %v1113 = vld [vmem:[#allocation2 + $0x18] sm:$0xff]
    %v1114 = vld [vmem:[#allocation2 + $0x20] sm:$0xff]
    %v1115 = vld [vmem:[%s151] ss:$8 sm:$0xf]
    %v1117 = vlaneseq
    %v1118 = vshrl.u32 %v1117, 7
    %v1119 = vsub.s32 0, %v1118
    %v1120 = vrot.slane %v1115, %v1119
    %v1121 = vlaneseq
    %v1122 = vshrl.u32 %v1121, 7
    %v1123 = vsub.s32 1, %v1122
    %v1124 = vrot.slane %v1115, %v1123
    %v1125 = vlaneseq
    %v1126 = vshrl.u32 %v1125, 7
    %v1127 = vsub.s32 2, %v1126
    %v1128 = vrot.slane %v1115, %v1127
    %v1129 = vlaneseq
    %v1130 = vshrl.u32 %v1129, 7
    %v1131 = vsub.s32 3, %v1130
    %v1132 = vrot.slane %v1115, %v1131
    %1133 = vrot.lane.b32.xlu0 %v1120, 112
    %v1134 = vpop.permute.xlu0 %1133
    %1135 = vrot.lane.b32.xlu0 %v1124, 112
    %v1136 = vpop.permute.xlu0 %1135
    %1137 = vrot.lane.b32.xlu0 %v1128, 112
    %v1138 = vpop.permute.xlu0 %1137
    %1139 = vrot.lane.b32.xlu0 %v1132, 112
    %v1140 = vpop.permute.xlu0 %1139
    %v1141 = vsel %vm178, %v1134, %v1136
    %v1142 = vsel %vm178, %v1136, %v1138
    %v1143 = vsel %vm178, %v1138, %v1140
    %v1149 = vmul.f32 %v1110, %v1134
    %v1150 = vmul.f32 %v1111, %v1141
    %v1151 = vmul.f32 %v1112, %v1142
    %v1152 = vmul.f32 %v1113, %v1143
    %v1153 = vmul.f32 %v1114, %v1140
    %v1154 = vpack.c.bf16 %v1149, %v1149
    %v1155 = vpack.c.bf16 %v1150, %v1150
    %v1156 = vpack.c.bf16 %v1151, %v1151
    %v1157 = vpack.c.bf16 %v1152, %v1152
    %v1158 = vpack.c.bf16 %v1153, %v1153
    %v1164 = vunpack.c.l.b16 %v1154
    %v1165 = vunpack.c.l.b16 %v1155
    %v1166 = vunpack.c.l.b16 %v1156
    %v1167 = vunpack.c.l.b16 %v1157
    %v1168 = vunpack.c.l.b16 %v1158
    %v1169 = vpack.c.b16 %v1165, %v1164
    %v1170 = vpack.c.b16 %v1167, %v1166
    %v1171 = vpack.c.b16 %v1168, %v1168
    %1172 = vrot.lane.b32.xlu0 %v1169, 16
    %v1173 = vpop.permute.xlu0 %1172
    %1174 = vrot.lane.b32.xlu0 %v1170, 16
    %v1175 = vpop.permute.xlu0 %1174
    %1176 = vrot.lane.b32.xlu0 %v1171, 16
    %v1177 = vpop.permute.xlu0 %1176
    %v1178 = vrot.slane %v1173, 4
    %v1179 = vrot.slane %v1175, 4
    %v1180 = vrot.slane %v1177, 4
    %v1181 = vsel %vm136, %v1178, %v1179
    %v1182 = vsel %vm220, %v1173, %v1181
    %v1183 = vsel %vm136, %v1179, %v1180
    %v1184 = vsel %vm220, %v1175, %v1183
    %1187 = vst [vmem:[#allocation3 + $0x10] sm:$0xff] %v1182
    %1188 = vst [vmem:[#allocation3 + $0x18] sm:$0xff] %v1184
    %v1189 = vld [vmem:[#allocation2] sm:$0xff]
    %v1190 = vld [vmem:[#allocation2 + $0x8] sm:$0xff]
    %v1191 = vld [vmem:[#allocation2 + $0x10] sm:$0xff]
    %v1192 = vld [vmem:[#allocation2 + $0x18] sm:$0xff]
    %v1193 = vld [vmem:[#allocation2 + $0x20] sm:$0xff]
    %v1194 = vld [vmem:[%s233] ss:$8 sm:$0xf]
    %v1196 = vlaneseq
    %v1197 = vshrl.u32 %v1196, 7
    %v1198 = vsub.s32 0, %v1197
    %v1199 = vrot.slane %v1194, %v1198
    %v1200 = vlaneseq
    %v1201 = vshrl.u32 %v1200, 7
    %v1202 = vsub.s32 1, %v1201
    %v1203 = vrot.slane %v1194, %v1202
    %v1204 = vlaneseq
    %v1205 = vshrl.u32 %v1204, 7
    %v1206 = vsub.s32 2, %v1205
    %v1207 = vrot.slane %v1194, %v1206
    %v1208 = vlaneseq
    %v1209 = vshrl.u32 %v1208, 7
    %v1210 = vsub.s32 3, %v1209
    %v1211 = vrot.slane %v1194, %v1210
    %1212 = vrot.lane.b32.xlu0 %v1199, 113
    %v1213 = vpop.permute.xlu0 %1212
    %1214 = vrot.lane.b32.xlu0 %v1203, 113
    %v1215 = vpop.permute.xlu0 %1214
    %1216 = vrot.lane.b32.xlu0 %v1207, 113
    %v1217 = vpop.permute.xlu0 %1216
    %1218 = vrot.lane.b32.xlu0 %v1211, 113
    %v1219 = vpop.permute.xlu0 %1218
    %v1220 = vsel %vm260, %v1213, %v1215
    %v1221 = vsel %vm260, %v1215, %v1217
    %v1222 = vsel %vm260, %v1217, %v1219
    %v1228 = vmul.f32 %v1189, %v1213
    %v1229 = vmul.f32 %v1190, %v1220
    %v1230 = vmul.f32 %v1191, %v1221
    %v1231 = vmul.f32 %v1192, %v1222
    %v1232 = vmul.f32 %v1193, %v1219
    %v1233 = vpack.c.bf16 %v1228, %v1228
    %v1234 = vpack.c.bf16 %v1229, %v1229
    %v1235 = vpack.c.bf16 %v1230, %v1230
    %v1236 = vpack.c.bf16 %v1231, %v1231
    %v1237 = vpack.c.bf16 %v1232, %v1232
    %v1243 = vunpack.c.l.b16 %v1233
    %v1244 = vunpack.c.l.b16 %v1234
    %v1245 = vunpack.c.l.b16 %v1235
    %v1246 = vunpack.c.l.b16 %v1236
    %v1247 = vunpack.c.l.b16 %v1237
    %v1248 = vpack.c.b16 %v1244, %v1243
    %v1249 = vpack.c.b16 %v1246, %v1245
    %v1250 = vpack.c.b16 %v1247, %v1247
    %1251 = vrot.lane.b32.xlu0 %v1248, 15
    %v1252 = vpop.permute.xlu0 %1251
    %1253 = vrot.lane.b32.xlu0 %v1249, 15
    %v1254 = vpop.permute.xlu0 %1253
    %1255 = vrot.lane.b32.xlu0 %v1250, 15
    %v1256 = vpop.permute.xlu0 %1255
    %v1257 = vrot.slane %v1252, 4
    %v1258 = vrot.slane %v1254, 4
    %v1259 = vrot.slane %v1256, 4
    %v1260 = vsel %vm136, %v1257, %v1258
    %v1261 = vsel %vm302, %v1252, %v1260
    %v1262 = vsel %vm136, %v1258, %v1259
    %v1263 = vsel %vm302, %v1254, %v1262
    %1266 = vst [vmem:[#allocation3 + $0x20] sm:$0xff] %v1261
    %1267 = vst [vmem:[#allocation3 + $0x28] sm:$0xff] %v1263
    %v1268 = vld [vmem:[#allocation2] sm:$0xff]
    %v1269 = vld [vmem:[#allocation2 + $0x8] sm:$0xff]
    %v1270 = vld [vmem:[#allocation2 + $0x10] sm:$0xff]
    %v1271 = vld [vmem:[#allocation2 + $0x18] sm:$0xff]
    %v1272 = vld [vmem:[#allocation2 + $0x20] sm:$0xff]
    %v1273 = vld [vmem:[%s315] ss:$8 sm:$0xf]
    %v1275 = vlaneseq
    %v1276 = vshrl.u32 %v1275, 7
    %v1277 = vsub.s32 0, %v1276
    %v1278 = vrot.slane %v1273, %v1277
    %v1279 = vlaneseq
    %v1280 = vshrl.u32 %v1279, 7
    %v1281 = vsub.s32 1, %v1280
    %v1282 = vrot.slane %v1273, %v1281
    %v1283 = vlaneseq
    %v1284 = vshrl.u32 %v1283, 7
    %v1285 = vsub.s32 2, %v1284
    %v1286 = vrot.slane %v1273, %v1285
    %v1287 = vlaneseq
    %v1288 = vshrl.u32 %v1287, 7
    %v1289 = vsub.s32 3, %v1288
    %v1290 = vrot.slane %v1273, %v1289
    %1291 = vrot.lane.b32.xlu0 %v1278, 127
    %v1292 = vpop.permute.xlu0 %1291
    %1293 = vrot.lane.b32.xlu0 %v1282, 127
    %v1294 = vpop.permute.xlu0 %1293
    %1295 = vrot.lane.b32.xlu0 %v1286, 127
    %v1296 = vpop.permute.xlu0 %1295
    %1297 = vrot.lane.b32.xlu0 %v1290, 127
    %v1298 = vpop.permute.xlu0 %1297
    %v1299 = vsel %vm342, %v1292, %v1294
    %v1300 = vsel %vm342, %v1294, %v1296
    %v1301 = vsel %vm342, %v1296, %v1298
    %v1307 = vmul.f32 %v1268, %v1292
    %v1308 = vmul.f32 %v1269, %v1299
    %v1309 = vmul.f32 %v1270, %v1300
    %v1310 = vmul.f32 %v1271, %v1301
    %v1311 = vmul.f32 %v1272, %v1298
    %v1312 = vpack.c.bf16 %v1307, %v1307
    %v1313 = vpack.c.bf16 %v1308, %v1308
    %v1314 = vpack.c.bf16 %v1309, %v1309
    %v1315 = vpack.c.bf16 %v1310, %v1310
    %v1316 = vpack.c.bf16 %v1311, %v1311
    %v1322 = vunpack.c.l.b16 %v1312
    %v1323 = vunpack.c.l.b16 %v1313
    %v1324 = vunpack.c.l.b16 %v1314
    %v1325 = vunpack.c.l.b16 %v1315
    %v1326 = vunpack.c.l.b16 %v1316
    %v1327 = vpack.c.b16 %v1323, %v1322
    %v1328 = vpack.c.b16 %v1325, %v1324
    %v1329 = vpack.c.b16 %v1326, %v1326
    %1330 = vrot.lane.b32.xlu0 %v1327, 1
    %v1331 = vpop.permute.xlu0 %1330
    %1332 = vrot.lane.b32.xlu0 %v1328, 1
    %v1333 = vpop.permute.xlu0 %1332
    %1334 = vrot.lane.b32.xlu0 %v1329, 1
    %v1335 = vpop.permute.xlu0 %1334
    %v1336 = vrot.slane %v1331, 4
    %v1337 = vrot.slane %v1333, 4
    %v1338 = vrot.slane %v1335, 4
    %v1339 = vsel %vm136, %v1336, %v1337
    %v1340 = vsel %vm384, %v1331, %v1339
    %v1341 = vsel %vm136, %v1337, %v1338
    %v1342 = vsel %vm384, %v1333, %v1341
    %1345 = vst [vmem:[#allocation3 + $0x30] sm:$0xff] %v1340
    %1346 = vst [vmem:[#allocation3 + $0x38] sm:$0xff] %v1342
    %v1347 = vld [vmem:[#allocation2 + $0x8] sm:$0xff]
    %v1348 = vld [vmem:[#allocation2 + $0x10] sm:$0xff]
    %v1349 = vld [vmem:[#allocation2 + $0x18] sm:$0xff]
    %v1350 = vld [vmem:[#allocation2 + $0x20] sm:$0xff]
    %v1351 = vld [vmem:[%s396] ss:$8 sm:$0xf]
    %v1353 = vlaneseq
    %v1354 = vshrl.u32 %v1353, 7
    %v1355 = vsub.s32 0, %v1354
    %v1356 = vrot.slane %v1351, %v1355
    %v1357 = vlaneseq
    %v1358 = vshrl.u32 %v1357, 7
    %v1359 = vsub.s32 1, %v1358
    %v1360 = vrot.slane %v1351, %v1359
    %v1361 = vlaneseq
    %v1362 = vshrl.u32 %v1361, 7
    %v1363 = vsub.s32 2, %v1362
    %v1364 = vrot.slane %v1351, %v1363
    %v1365 = vlaneseq
    %v1366 = vshrl.u32 %v1365, 7
    %v1367 = vsub.s32 3, %v1366
    %v1368 = vrot.slane %v1351, %v1367
    %v1373 = vmul.f32 %v1347, %v1356
    %v1374 = vmul.f32 %v1348, %v1360
    %v1375 = vmul.f32 %v1349, %v1364
    %v1376 = vmul.f32 %v1350, %v1368
    %v1377 = vpack.c.bf16 %v1373, %v1373
    %v1378 = vpack.c.bf16 %v1374, %v1374
    %v1379 = vpack.c.bf16 %v1375, %v1375
    %v1380 = vpack.c.bf16 %v1376, %v1376
    %v1385 = vunpack.c.l.b16 %v1377
    %v1386 = vunpack.c.l.b16 %v1378
    %v1387 = vunpack.c.l.b16 %v1379
    %v1388 = vunpack.c.l.b16 %v1380
    %v1389 = vpack.c.b16 %v1386, %v1385
    %v1390 = vpack.c.b16 %v1388, %v1387
    %1393 = vst [vmem:[#allocation3 + $0x40] sm:$0xff] %v1389
    %1394 = vst [vmem:[#allocation3 + $0x48] sm:$0xff] %v1390
    %v1395 = vld [vmem:[#allocation2 + $0x8] sm:$0xff]
    %v1396 = vld [vmem:[#allocation2 + $0x10] sm:$0xff]
    %v1397 = vld [vmem:[#allocation2 + $0x18] sm:$0xff]
    %v1398 = vld [vmem:[#allocation2 + $0x20] sm:$0xff]
    %v1399 = vld [vmem:[#allocation2 + $0x28] sm:$0xff]
    %v1400 = vld [vmem:[%s446] ss:$8 sm:$0xf]
    %v1402 = vlaneseq
    %v1403 = vshrl.u32 %v1402, 7
    %v1404 = vsub.s32 0, %v1403
    %v1405 = vrot.slane %v1400, %v1404
    %v1406 = vlaneseq
    %v1407 = vshrl.u32 %v1406, 7
    %v1408 = vsub.s32 1, %v1407
    %v1409 = vrot.slane %v1400, %v1408
    %v1410 = vlaneseq
    %v1411 = vshrl.u32 %v1410, 7
    %v1412 = vsub.s32 2, %v1411
    %v1413 = vrot.slane %v1400, %v1412
    %v1414 = vlaneseq
    %v1415 = vshrl.u32 %v1414, 7
    %v1416 = vsub.s32 3, %v1415
    %v1417 = vrot.slane %v1400, %v1416
    %1418 = vrot.lane.b32.xlu0 %v1405, 1
    %v1419 = vpop.permute.xlu0 %1418
    %1420 = vrot.lane.b32.xlu0 %v1409, 1
    %v1421 = vpop.permute.xlu0 %1420
    %1422 = vrot.lane.b32.xlu0 %v1413, 1
    %v1423 = vpop.permute.xlu0 %1422
    %1424 = vrot.lane.b32.xlu0 %v1417, 1
    %v1425 = vpop.permute.xlu0 %1424
    %v1426 = vsel %vm473, %v1419, %v1421
    %v1427 = vsel %vm473, %v1421, %v1423
    %v1428 = vsel %vm473, %v1423, %v1425
    %v1434 = vmul.f32 %v1395, %v1419
    %v1435 = vmul.f32 %v1396, %v1426
    %v1436 = vmul.f32 %v1397, %v1427
    %v1437 = vmul.f32 %v1398, %v1428
    %v1438 = vmul.f32 %v1399, %v1425
    %v1439 = vpack.c.bf16 %v1434, %v1434
    %v1440 = vpack.c.bf16 %v1435, %v1435
    %v1441 = vpack.c.bf16 %v1436, %v1436
    %v1442 = vpack.c.bf16 %v1437, %v1437
    %v1443 = vpack.c.bf16 %v1438, %v1438
    %v1449 = vunpack.c.l.b16 %v1439
    %v1450 = vunpack.c.l.b16 %v1440
    %v1451 = vunpack.c.l.b16 %v1441
    %v1452 = vunpack.c.l.b16 %v1442
    %v1453 = vunpack.c.l.b16 %v1443
    %v1454 = vpack.c.b16 %v1450, %v1449
    %v1455 = vpack.c.b16 %v1452, %v1451
    %v1456 = vpack.c.b16 %v1453, %v1453
    %1457 = vrot.lane.b32.xlu0 %v1454, 127
    %v1458 = vpop.permute.xlu0 %1457
    %1459 = vrot.lane.b32.xlu0 %v1455, 127
    %v1460 = vpop.permute.xlu0 %1459
    %1461 = vrot.lane.b32.xlu0 %v1456, 127
    %v1462 = vpop.permute.xlu0 %1461
    %v1463 = vrot.slane %v1458, 4
    %v1464 = vrot.slane %v1460, 4
    %v1465 = vrot.slane %v1462, 4
    %v1466 = vsel %vm136, %v1463, %v1464
    %v1467 = vsel %vm515, %v1458, %v1466
    %v1468 = vsel %vm136, %v1464, %v1465
    %v1469 = vsel %vm515, %v1460, %v1468
    %1472 = vst [vmem:[#allocation3 + $0x50] sm:$0xff] %v1467
    %1473 = vst [vmem:[#allocation3 + $0x58] sm:$0xff] %v1469
    %v1474 = vld [vmem:[#allocation2 + $0x8] sm:$0xff]
    %v1475 = vld [vmem:[#allocation2 + $0x10] sm:$0xff]
    %v1476 = vld [vmem:[#allocation2 + $0x18] sm:$0xff]
    %v1477 = vld [vmem:[#allocation2 + $0x20] sm:$0xff]
    %v1478 = vld [vmem:[#allocation2 + $0x28] sm:$0xff]
    %v1479 = vld [vmem:[%s528] ss:$8 sm:$0xf]
    %v1481 = vlaneseq
    %v1482 = vshrl.u32 %v1481, 7
    %v1483 = vsub.s32 0, %v1482
    %v1484 = vrot.slane %v1479, %v1483
    %v1485 = vlaneseq
    %v1486 = vshrl.u32 %v1485, 7
    %v1487 = vsub.s32 1, %v1486
    %v1488 = vrot.slane %v1479, %v1487
    %v1489 = vlaneseq
    %v1490 = vshrl.u32 %v1489, 7
    %v1491 = vsub.s32 2, %v1490
    %v1492 = vrot.slane %v1479, %v1491
    %v1493 = vlaneseq
    %v1494 = vshrl.u32 %v1493, 7
    %v1495 = vsub.s32 3, %v1494
    %v1496 = vrot.slane %v1479, %v1495
    %1497 = vrot.lane.b32.xlu0 %v1484, 15
    %v1498 = vpop.permute.xlu0 %1497
    %1499 = vrot.lane.b32.xlu0 %v1488, 15
    %v1500 = vpop.permute.xlu0 %1499
    %1501 = vrot.lane.b32.xlu0 %v1492, 15
    %v1502 = vpop.permute.xlu0 %1501
    %1503 = vrot.lane.b32.xlu0 %v1496, 15
    %v1504 = vpop.permute.xlu0 %1503
    %v1505 = vsel %vm555, %v1498, %v1500
    %v1506 = vsel %vm555, %v1500, %v1502
    %v1507 = vsel %vm555, %v1502, %v1504
    %v1513 = vmul.f32 %v1474, %v1498
    %v1514 = vmul.f32 %v1475, %v1505
    %v1515 = vmul.f32 %v1476, %v1506
    %v1516 = vmul.f32 %v1477, %v1507
    %v1517 = vmul.f32 %v1478, %v1504
    %v1518 = vpack.c.bf16 %v1513, %v1513
    %v1519 = vpack.c.bf16 %v1514, %v1514
    %v1520 = vpack.c.bf16 %v1515, %v1515
    %v1521 = vpack.c.bf16 %v1516, %v1516
    %v1522 = vpack.c.bf16 %v1517, %v1517
    %v1528 = vunpack.c.l.b16 %v1518
    %v1529 = vunpack.c.l.b16 %v1519
    %v1530 = vunpack.c.l.b16 %v1520
    %v1531 = vunpack.c.l.b16 %v1521
    %v1532 = vunpack.c.l.b16 %v1522
    %v1533 = vpack.c.b16 %v1529, %v1528
    %v1534 = vpack.c.b16 %v1531, %v1530
    %v1535 = vpack.c.b16 %v1532, %v1532
    %1536 = vrot.lane.b32.xlu0 %v1533, 113
    %v1537 = vpop.permute.xlu0 %1536
    %1538 = vrot.lane.b32.xlu0 %v1534, 113
    %v1539 = vpop.permute.xlu0 %1538
    %1540 = vrot.lane.b32.xlu0 %v1535, 113
    %v1541 = vpop.permute.xlu0 %1540
    %v1542 = vrot.slane %v1537, 4
    %v1543 = vrot.slane %v1539, 4
    %v1544 = vrot.slane %v1541, 4
    %v1545 = vsel %vm136, %v1542, %v1543
    %v1546 = vsel %vm597, %v1537, %v1545
    %v1547 = vsel %vm136, %v1543, %v1544
    %v1548 = vsel %vm597, %v1539, %v1547
    %1551 = vst [vmem:[#allocation3 + $0x60] sm:$0xff] %v1546
    %1552 = vst [vmem:[#allocation3 + $0x68] sm:$0xff] %v1548
    %v1553 = vld [vmem:[#allocation2 + $0x8] sm:$0xff]
    %v1554 = vld [vmem:[#allocation2 + $0x10] sm:$0xff]
    %v1555 = vld [vmem:[#allocation2 + $0x18] sm:$0xff]
    %v1556 = vld [vmem:[#allocation2 + $0x20] sm:$0xff]
    %v1557 = vld [vmem:[#allocation2 + $0x28] sm:$0xff]
    %v1558 = vld [vmem:[%s610] ss:$8 sm:$0xf]
    %v1560 = vlaneseq
    %v1561 = vshrl.u32 %v1560, 7
    %v1562 = vsub.s32 0, %v1561
    %v1563 = vrot.slane %v1558, %v1562
    %v1564 = vlaneseq
    %v1565 = vshrl.u32 %v1564, 7
    %v1566 = vsub.s32 1, %v1565
    %v1567 = vrot.slane %v1558, %v1566
    %v1568 = vlaneseq
    %v1569 = vshrl.u32 %v1568, 7
    %v1570 = vsub.s32 2, %v1569
    %v1571 = vrot.slane %v1558, %v1570
    %v1572 = vlaneseq
    %v1573 = vshrl.u32 %v1572, 7
    %v1574 = vsub.s32 3, %v1573
    %v1575 = vrot.slane %v1558, %v1574
    %1576 = vrot.lane.b32.xlu0 %v1563, 16
    %v1577 = vpop.permute.xlu0 %1576
    %1578 = vrot.lane.b32.xlu0 %v1567, 16
    %v1579 = vpop.permute.xlu0 %1578
    %1580 = vrot.lane.b32.xlu0 %v1571, 16
    %v1581 = vpop.permute.xlu0 %1580
    %1582 = vrot.lane.b32.xlu0 %v1575, 16
    %v1583 = vpop.permute.xlu0 %1582
    %v1584 = vsel %vm637, %v1577, %v1579
    %v1585 = vsel %vm637, %v1579, %v1581
    %v1586 = vsel %vm637, %v1581, %v1583
    %v1592 = vmul.f32 %v1553, %v1577
    %v1593 = vmul.f32 %v1554, %v1584
    %v1594 = vmul.f32 %v1555, %v1585
    %v1595 = vmul.f32 %v1556, %v1586
    %v1596 = vmul.f32 %v1557, %v1583
    %v1597 = vpack.c.bf16 %v1592, %v1592
    %v1598 = vpack.c.bf16 %v1593, %v1593
    %v1599 = vpack.c.bf16 %v1594, %v1594
    %v1600 = vpack.c.bf16 %v1595, %v1595
    %v1601 = vpack.c.bf16 %v1596, %v1596
    %v1607 = vunpack.c.l.b16 %v1597
    %v1608 = vunpack.c.l.b16 %v1598
    %v1609 = vunpack.c.l.b16 %v1599
    %v1610 = vunpack.c.l.b16 %v1600
    %v1611 = vunpack.c.l.b16 %v1601
    %v1612 = vpack.c.b16 %v1608, %v1607
    %v1613 = vpack.c.b16 %v1610, %v1609
    %v1614 = vpack.c.b16 %v1611, %v1611
    %1615 = vrot.lane.b32.xlu0 %v1612, 112
    %v1616 = vpop.permute.xlu0 %1615
    %1617 = vrot.lane.b32.xlu0 %v1613, 112
    %v1618 = vpop.permute.xlu0 %1617
    %1619 = vrot.lane.b32.xlu0 %v1614, 112
    %v1620 = vpop.permute.xlu0 %1619
    %v1621 = vrot.slane %v1616, 4
    %v1622 = vrot.slane %v1618, 4
    %v1623 = vrot.slane %v1620, 4
    %v1624 = vsel %vm136, %v1621, %v1622
    %v1625 = vsel %vm679, %v1616, %v1624
    %v1626 = vsel %vm136, %v1622, %v1623
    %v1627 = vsel %vm679, %v1618, %v1626
    %1630 = vst [vmem:[#allocation3 + $0x70] sm:$0xff] %v1625
    %1631 = vst [vmem:[#allocation3 + $0x78] sm:$0xff] %v1627
    %v1632 = vld [vmem:[#allocation2 + $0x8] sm:$0xff]
    %v1633 = vld [vmem:[#allocation2 + $0x10] sm:$0xff]
    %v1634 = vld [vmem:[#allocation2 + $0x18] sm:$0xff]
    %v1635 = vld [vmem:[#allocation2 + $0x20] sm:$0xff]
    %v1636 = vld [vmem:[#allocation2 + $0x28] sm:$0xff]
    %v1637 = vld [vmem:[%s692] ss:$8 sm:$0xf]
    %v1639 = vlaneseq
    %v1640 = vshrl.u32 %v1639, 7
    %v1641 = vsub.s32 0, %v1640
    %v1642 = vrot.slane %v1637, %v1641
    %v1643 = vlaneseq
    %v1644 = vshrl.u32 %v1643, 7
    %v1645 = vsub.s32 1, %v1644
    %v1646 = vrot.slane %v1637, %v1645
    %v1647 = vlaneseq
    %v1648 = vshrl.u32 %v1647, 7
    %v1649 = vsub.s32 2, %v1648
    %v1650 = vrot.slane %v1637, %v1649
    %v1651 = vlaneseq
    %v1652 = vshrl.u32 %v1651, 7
    %v1653 = vsub.s32 3, %v1652
    %v1654 = vrot.slane %v1637, %v1653
    %1655 = vrot.lane.b32.xlu0 %v1642, 17
    %v1656 = vpop.permute.xlu0 %1655
    %1657 = vrot.lane.b32.xlu0 %v1646, 17
    %v1658 = vpop.permute.xlu0 %1657
    %1659 = vrot.lane.b32.xlu0 %v1650, 17
    %v1660 = vpop.permute.xlu0 %1659
    %1661 = vrot.lane.b32.xlu0 %v1654, 17
    %v1662 = vpop.permute.xlu0 %1661
    %v1663 = vsel %vm719, %v1656, %v1658
    %v1664 = vsel %vm719, %v1658, %v1660
    %v1665 = vsel %vm719, %v1660, %v1662
    %v1671 = vmul.f32 %v1632, %v1656
    %v1672 = vmul.f32 %v1633, %v1663
    %v1673 = vmul.f32 %v1634, %v1664
    %v1674 = vmul.f32 %v1635, %v1665
    %v1675 = vmul.f32 %v1636, %v1662
    %v1676 = vpack.c.bf16 %v1671, %v1671
    %v1677 = vpack.c.bf16 %v1672, %v1672
    %v1678 = vpack.c.bf16 %v1673, %v1673
    %v1679 = vpack.c.bf16 %v1674, %v1674
    %v1680 = vpack.c.bf16 %v1675, %v1675
    %v1686 = vunpack.c.l.b16 %v1676
    %v1687 = vunpack.c.l.b16 %v1677
    %v1688 = vunpack.c.l.b16 %v1678
    %v1689 = vunpack.c.l.b16 %v1679
    %v1690 = vunpack.c.l.b16 %v1680
    %v1691 = vpack.c.b16 %v1687, %v1686
    %v1692 = vpack.c.b16 %v1689, %v1688
    %v1693 = vpack.c.b16 %v1690, %v1690
    %1694 = vrot.lane.b32.xlu0 %v1691, 111
    %v1695 = vpop.permute.xlu0 %1694
    %1696 = vrot.lane.b32.xlu0 %v1692, 111
    %v1697 = vpop.permute.xlu0 %1696
    %1698 = vrot.lane.b32.xlu0 %v1693, 111
    %v1699 = vpop.permute.xlu0 %1698
    %v1700 = vrot.slane %v1695, 4
    %v1701 = vrot.slane %v1697, 4
    %v1702 = vrot.slane %v1699, 4
    %v1703 = vsel %vm136, %v1700, %v1701
    %v1704 = vsel %vm761, %v1695, %v1703
    %v1705 = vsel %vm136, %v1701, %v1702
    %v1706 = vsel %vm761, %v1697, %v1705
    %1709 = vst [vmem:[#allocation3 + $0x80] sm:$0xff] %v1704
    %1710 = vst [vmem:[#allocation3 + $0x88] sm:$0xff] %v1706
    %v1711 = vld [vmem:[%s5] sm:$0xf]
    %v1712 = vld [vmem:[#allocation3] sm:$0xff]
    %v1713 = vld [vmem:[#allocation3 + $0x8] sm:$0xff]
    %v1714 = vld [vmem:[#allocation3 + $0x10] sm:$0xff]
    %v1715 = vld [vmem:[#allocation3 + $0x18] sm:$0xff]
    %v1716 = vld [vmem:[#allocation3 + $0x20] sm:$0xff]
    %v1717 = vld [vmem:[#allocation3 + $0x28] sm:$0xff]
    %v1718 = vld [vmem:[#allocation3 + $0x30] sm:$0xff]
    %v1719 = vld [vmem:[#allocation3 + $0x38] sm:$0xff]
    %v1720 = vld [vmem:[#allocation3 + $0x40] sm:$0xff]
    %v1721 = vld [vmem:[#allocation3 + $0x48] sm:$0xff]
    %v1722 = vld [vmem:[#allocation3 + $0x50] sm:$0xff]
    %v1723 = vld [vmem:[#allocation3 + $0x58] sm:$0xff]
    %v1724 = vld [vmem:[#allocation3 + $0x60] sm:$0xff]
    %v1725 = vld [vmem:[#allocation3 + $0x68] sm:$0xff]
    %v1726 = vld [vmem:[#allocation3 + $0x70] sm:$0xff]
    %v1727 = vld [vmem:[#allocation3 + $0x78] sm:$0xff]
    %v1728 = vld [vmem:[#allocation3 + $0x80] sm:$0xff]
    %v1729 = vld [vmem:[#allocation3 + $0x88] sm:$0xff]
    %v1748 = vunpack.c.l.b16 %v1712
    %v1749 = vunpack.c.h.b16 %v1712
    %v1750 = vunpack.c.l.b16 %v1713
    %v1751 = vunpack.c.h.b16 %v1713
    %v1752 = vunpack.c.l.b16 %v1714
    %v1753 = vunpack.c.h.b16 %v1714
    %v1754 = vunpack.c.l.b16 %v1715
    %v1755 = vunpack.c.h.b16 %v1715
    %v1756 = vunpack.c.l.b16 %v1716
    %v1757 = vunpack.c.h.b16 %v1716
    %v1758 = vunpack.c.l.b16 %v1717
    %v1759 = vunpack.c.h.b16 %v1717
    %v1760 = vunpack.c.l.b16 %v1718
    %v1761 = vunpack.c.h.b16 %v1718
    %v1762 = vunpack.c.l.b16 %v1719
    %v1763 = vunpack.c.h.b16 %v1719
    %v1764 = vunpack.c.l.b16 %v1720
    %v1765 = vunpack.c.h.b16 %v1720
    %v1766 = vunpack.c.l.b16 %v1721
    %v1767 = vunpack.c.h.b16 %v1721
    %v1768 = vunpack.c.l.b16 %v1722
    %v1769 = vunpack.c.h.b16 %v1722
    %v1770 = vunpack.c.l.b16 %v1723
    %v1771 = vunpack.c.h.b16 %v1723
    %v1772 = vunpack.c.l.b16 %v1724
    %v1773 = vunpack.c.h.b16 %v1724
    %v1774 = vunpack.c.l.b16 %v1725
    %v1775 = vunpack.c.h.b16 %v1725
    %v1776 = vunpack.c.l.b16 %v1726
    %v1777 = vunpack.c.h.b16 %v1726
    %v1778 = vunpack.c.l.b16 %v1727
    %v1779 = vunpack.c.h.b16 %v1727
    %v1780 = vunpack.c.l.b16 %v1728
    %v1781 = vunpack.c.h.b16 %v1728
    %v1782 = vunpack.c.l.b16 %v1729
    %v1783 = vunpack.c.h.b16 %v1729
    %v1784 = vpack.c.b16 %v1752, %v1748
    %v1785 = vpack.c.b16 %v1753, %v1749
    %v1786 = vpack.c.b16 %v1754, %v1750
    %v1787 = vpack.c.b16 %v1755, %v1751
    %v1788 = vpack.c.b16 %v1760, %v1756
    %v1789 = vpack.c.b16 %v1761, %v1757
    %v1790 = vpack.c.b16 %v1762, %v1758
    %v1791 = vpack.c.b16 %v1763, %v1759
    %v1792 = vpack.c.b16 %v1768, %v1764
    %v1793 = vpack.c.b16 %v1769, %v1765
    %v1794 = vpack.c.b16 %v1770, %v1766
    %v1795 = vpack.c.b16 %v1771, %v1767
    %v1796 = vpack.c.b16 %v1776, %v1772
    %v1797 = vpack.c.b16 %v1777, %v1773
    %v1798 = vpack.c.b16 %v1778, %v1774
    %v1799 = vpack.c.b16 %v1779, %v1775
    %v1800 = vpack.c.b16 %v1780, %v1780
    %v1801 = vpack.c.b16 %v1781, %v1781
    %v1802 = vpack.c.b16 %v1782, %v1782
    %v1803 = vpack.c.b16 %v1783, %v1783
    %v1821 = vsel %vm878, %v1711, 0
    %v1824 = vsel %vm882, %v1800, 0
    %v1827 = vsel %vm882, %v1801, 0
    %v1830 = vsel %vm882, %v1802, 0
    %v1833 = vsel %vm882, %v1803, 0
    %1835 = vmatprep.subr.bf16.mxu0 0
    %1836 = vmatpush1.bf16.msra.mxu0 0
    %1837 = vmatprep.subr.bf16.mxu0 0
    %1838 = vmatpush1.bf16.msra.mxu0 0
    %1839 = vmatprep.subr.bf16.mxu0 0
    %1840 = vmatpush1.bf16.msra.mxu0 0
    %1841 = vmatprep.subr.bf16.mxu0 %v1827
    %1842 = vmatpush1.bf16.msra.mxu0 %v1824
    %1843 = vmatprep.subr.bf16.mxu0 %v1797
    %1844 = vmatpush1.bf16.msra.mxu0 %v1796
    %1845 = vmatprep.subr.bf16.mxu0 %v1793
    %1846 = vmatpush1.bf16.msra.mxu0 %v1792
    %1847 = vmatprep.subr.bf16.mxu0 %v1789
    %1848 = vmatpush1.bf16.msra.mxu0 %v1788
    %1849 = vmatprep.subr.bf16.mxu0 %v1785
    %1850 = vmatpush1.bf16.msra.mxu0 %v1784
    %1851 = vmatprep.subr.bf16.mxu0 0
    %1852 = vmatpush2.bf16.msra.mxu0 0
    %1853 = vmatprep.subr.bf16.mxu0 0
    %1854 = vmatpush2.bf16.msra.mxu0 0
    %1855 = vmatprep.subr.bf16.mxu0 0
    %1856 = vmatpush2.bf16.msra.mxu0 0
    %1857 = vmatprep.subr.bf16.mxu0 0
    %1858 = vmatpush2.bf16.msra.mxu0 0
    %1859 = vmatprep.subr.bf16.mxu0 0
    %1860 = vmatpush2.bf16.msra.mxu0 0
    %1861 = vmatprep.subr.bf16.mxu0 0
    %1862 = vmatpush2.bf16.msra.mxu0 0
    %1863 = vmatprep.subr.bf16.mxu0 0
    %1864 = vmatpush2.bf16.msra.mxu0 0
    %1865 = vmatprep.subr.bf16.mxu0 0
    %1866 = vmatpush2.bf16.msra.mxu0 0
    %1867 = vmatprep.mubr.bf16.mxu0 0
    %1868 = vmatmul.mubr.bf16.gmra.mxu0 %v1821
    %v1869 = vpop.f32.mrf.mxu0
    %v1870 = vadd.f32 0.0, %v1869
    %v1871 = vpop.f32.mrf.mxu0
    %v1872 = vadd.f32 0.0, %v1871
    %v1873 = vpop.f32.mrf.mxu0
    %v1874 = vpop.f32.mrf.mxu0
    %1875 = vdwg.mxu0
    %1876 = vmatprep.subr.bf16.mxu0 0
    %1877 = vmatpush1.bf16.msra.mxu0 0
    %1878 = vmatprep.subr.bf16.mxu0 0
    %1879 = vmatpush1.bf16.msra.mxu0 0
    %1880 = vmatprep.subr.bf16.mxu0 0
    %1881 = vmatpush1.bf16.msra.mxu0 0
    %1882 = vmatprep.subr.bf16.mxu0 %v1833
    %1883 = vmatpush1.bf16.msra.mxu0 %v1830
    %1884 = vmatprep.subr.bf16.mxu0 %v1799
    %1885 = vmatpush1.bf16.msra.mxu0 %v1798
    %1886 = vmatprep.subr.bf16.mxu0 %v1795
    %1887 = vmatpush1.bf16.msra.mxu0 %v1794
    %1888 = vmatprep.subr.bf16.mxu0 %v1791
    %1889 = vmatpush1.bf16.msra.mxu0 %v1790
    %1890 = vmatprep.subr.bf16.mxu0 %v1787
    %1891 = vmatpush1.bf16.msra.mxu0 %v1786
    %1892 = vmatprep.subr.bf16.mxu0 0
    %1893 = vmatpush2.bf16.msra.mxu0 0
    %1894 = vmatprep.subr.bf16.mxu0 0
    %1895 = vmatpush2.bf16.msra.mxu0 0
    %1896 = vmatprep.subr.bf16.mxu0 0
    %1897 = vmatpush2.bf16.msra.mxu0 0
    %1898 = vmatprep.subr.bf16.mxu0 0
    %1899 = vmatpush2.bf16.msra.mxu0 0
    %1900 = vmatprep.subr.bf16.mxu0 0
    %1901 = vmatpush2.bf16.msra.mxu0 0
    %1902 = vmatprep.subr.bf16.mxu0 0
    %1903 = vmatpush2.bf16.msra.mxu0 0
    %1904 = vmatprep.subr.bf16.mxu0 0
    %1905 = vmatpush2.bf16.msra.mxu0 0
    %1906 = vmatprep.subr.bf16.mxu0 0
    %1907 = vmatpush2.bf16.msra.mxu0 0
    %1908 = vmatprep.mubr.bf16.mxu0 0
    %1909 = vmatmul.mubr.bf16.gmra.mxu0 %v1821
    %v1910 = vpop.f32.mrf.mxu0
    %v1911 = vadd.f32 0.0, %v1910
    %v1912 = vpop.f32.mrf.mxu0
    %v1913 = vadd.f32 0.0, %v1912
    %v1914 = vpop.f32.mrf.mxu0
    %v1915 = vpop.f32.mrf.mxu0
    %1916 = vdwg.mxu0
    %v1917 = vadd.f32 %v1870, %v1872
    %v1918 = vadd.f32 %v1917, %v1911
    %v1919 = vadd.f32 %v1918, %v1913
    %1920 = vadd.xlane.f32.xlu0 %v1919
    %v1921 = vpop.xlane.xlu0 %1920
    %v1922 = vmul.f32 %v1921, 0.001953125
    %v1923 = vsub.f32 %v1870, %v1922
    %v1924 = vsub.f32 %v1872, %v1922
    %v1925 = vsub.f32 %v1911, %v1922
    %v1926 = vsub.f32 %v1913, %v1922
    %v1927 = vmul.f32 %v1923, %v1923
    %v1928 = vmul.f32 %v1924, %v1924
    %v1929 = vmul.f32 %v1925, %v1925
    %v1930 = vmul.f32 %v1926, %v1926
    %v1931 = vadd.f32 %v1927, %v1928
    %v1932 = vadd.f32 %v1931, %v1929
    %v1933 = vadd.f32 %v1932, %v1930
    %1934 = vadd.xlane.f32.xlu0 %v1933
    %v1935 = vpop.xlane.xlu0 %1934
    %v1936 = vmul.f32 %v1935, 0.001953125
    %v1937 = vadd.f32 %v1936, 1e-05
    %v1938 = vrsqrt.pop %v1937
    %v1939 = vmul.f32 %v1923, %v1938
    %v1940 = vmul.f32 %v1924, %v1938
    %v1941 = vmul.f32 %v1925, %v1938
    %v1942 = vmul.f32 %v1926, %v1938
    %v1943 = vld [vmem:[%s6] sm:$0xff]
    %1945 = vset.pattern.permute.xlu0 0
    %1946 = vperm.xlu0 %1945, %v1943
    %v1947 = vpop.permute.xlu0 %1946
    %v1949 = vmul.f32 %v1939, %v1947
    %v1950 = vmul.f32 %v1940, %v1947
    %v1951 = vmul.f32 %v1941, %v1947
    %v1952 = vmul.f32 %v1942, %v1947
    %v1953 = vld [vmem:[%s7] sm:$0xff]
    %1955 = vset.pattern.permute.xlu0 0
    %1956 = vperm.xlu0 %1955, %v1953
    %v1957 = vpop.permute.xlu0 %1956
    %v1959 = vadd.f32 %v1949, %v1957
    %v1960 = vadd.f32 %v1950, %v1957
    %v1961 = vadd.f32 %v1951, %v1957
    %v1962 = vadd.f32 %v1952, %v1957
    %v1963 = vadd.f32 %v1959, %v64
    %v1964 = vadd.f32 %v1960, %v65
    %v1965 = vadd.f32 %v1961, %v66
    %v1966 = vadd.f32 %v1962, %v67
    %v1967 = vmax.f32 %v1963, 0.0
    %v1968 = vmax.f32 %v1964, 0.0
    %v1969 = vmax.f32 %v1965, 0.0
    %v1970 = vmax.f32 %v1966, 0.0
    %v1973 = vcombine.low %v1967, %v1968
    %1975 = vst [vmem:[#allocation7] sm:$0xff] %v1973
    %v1978 = vcombine.low %v1969, %v1970
    %s1980 = scalar_lea.vmem [#allocation7], 8
    %1981 = vst [vmem:[%s1980] sm:$0xff] %v1978
    // Predicated region
    $region38: #{tpu_custom_call.1} parent=1 // pred_check
      _
    $region39: #{tpu_custom_call.1} parent=1 // pred_check_branch
      %1983 = sbr.rel (0) target = $region41
    $region40: #{tpu_custom_call.1} parent=1 // pred_region
      %s1985 = ssub.s32 256, 256
      %1986 = vsyncadd [#allocation6], %s1985
      %s1987 = sshll.u32 [#allocation7], 4
      %s1988 = int_to_ptr.vmem [resolvable:$true] %s1987
      %1993 = dma.vmem_to_hbm [thread:$0]  %s1988, 256, %s8, [#allocation6], 128, 128, 8
    $region41: #{tpu_custom_call.1} parent=1 // pred_fallthru
      _
    // Predicated region
    $region42: #{tpu_custom_call.1} parent=1 // pred_check
      _
    $region43: #{tpu_custom_call.1} parent=1 // pred_check_branch
      %1995 = sbr.rel (0) target = $region45
    $region44: #{tpu_custom_call.1} parent=1 // pred_region
      %1996 = dma.done [#allocation6], 256
    $region45: #{tpu_custom_call.1} parent=1 // pred_fallthru
      _
    %1997 = vsyncpa [#allocation5], 1
    %1998 = vsyncpa [#allocation6], 1

</llo_original>
